<compile_context>
chip_gen: v7x
topology: tpu7x:2x2x1
jax: 0.10.0
libtpu: 0.0.40
codegen_flags: <defaults>
</compile_context>

<pallas_src>
import math

import numpy as np
import jax
import jax.numpy as jnp
from jax.experimental import pallas as pl
from jax.experimental.pallas import tpu as pltpu


def _round_up(x, m):
    return (x + m - 1) // m * m


def _pad2d(a, rows, cols):
    r, c = a.shape
    if (r, c) == (rows, cols):
        return a
    return jnp.pad(a, ((0, rows - r), (0, cols - c)))


# -----------------------------------------------------------------------------
# Pallas kernel: tiled  x @ W^T  with LoRA + bias folded into the k==0 init.
# -----------------------------------------------------------------------------
def _lora_qkv_kernel(x_ref, wt_ref, aa_ref, mt_ref, b_ref, o_ref, acc_ref):
    k = pl.program_id(2)

    @pl.when(k == 0)
    def _init():
        # Seed accumulator with LoRA epilogue + bias: (tm,Rp)@(Rp,tn) is tiny
        # (Rp=128 vs C), runs while the first W tile is still streaming in, and
        # keeps the final k step a pure cast+store (only 1 vst slot on v5e).
        acc_ref[...] = (
            jnp.dot(aa_ref[...], mt_ref[...], preferred_element_type=jnp.float32)
            + b_ref[...])

    # Main pretrained matmul: (tm, tk) @ (tk, tn) accumulated in f32.
    acc_ref[...] += jnp.dot(x_ref[...], wt_ref[...],
                            preferred_element_type=jnp.float32)

    @pl.when(k == pl.num_programs(2) - 1)
    def _store():
        o_ref[...] = acc_ref[...].astype(o_ref.dtype)


# -----------------------------------------------------------------------------
# One-time parameter preparation (hoisted out of the per-call path).
# -----------------------------------------------------------------------------
def prepare_qkv_params(W, bias, Bpad, scaling, *, tn=512, tk=1024,
                       weight_dtype=jnp.bfloat16):
    """Pad / transpose / cast the frozen weights once.

    W: (out, C); bias: (out,); Bpad: (out, R_total); scaling: float.
    Returns a dict of device arrays + tile metadata consumed by
    lora_qkv_forward.  Call this at parameter-load time, not per forward.
    """
    out_features, C = W.shape
    R_total = Bpad.shape[1]

    tn = min(tn, _round_up(out_features, 128))
    tk = min(tk, _round_up(C, 128))
    Cp = _round_up(C, tk)
    Op = _round_up(out_features, tn)
    Rp = _round_up(max(R_total, 1), 128)   # pad tiny LoRA rank to one lane group

    wt_p = _pad2d(W.T, Cp, Op).astype(weight_dtype)
    # Fold LoRA scaling into B once; keep it in f32 (tiny, <3% of MXU work).
    mt_p = _pad2d((Bpad * float(scaling)).T, Rp, Op).astype(jnp.float32)
    b_p = _pad2d(bias.reshape(1, out_features), 1, Op).astype(jnp.float32)

    return dict(wt=wt_p, mt=mt_p, b=b_p,
                out_features=out_features, C=C,
                Cp=Cp, Op=Op, Rp=Rp, tn=tn, tk=tk)


# -----------------------------------------------------------------------------
# Per-call forward (only x-side work happens here).
# -----------------------------------------------------------------------------
def lora_qkv_forward(x, A, prepared, *, tm=512,
                     compute_dtype=jnp.bfloat16, out_dtype=None):
    """Fused LoRA QKV forward.

    x: (B, T, C); A: (R_total, C); prepared: output of prepare_qkv_params.
    compute_dtype should match the weight_dtype used in prepare_qkv_params.
    """
    Bsz, T, C = x.shape
    assert C == prepared["C"]
    out_features = prepared["out_features"]
    Cp, Op, Rp = prepared["Cp"], prepared["Op"], prepared["Rp"]
    tn, tk = prepared["tn"], prepared["tk"]
    if out_dtype is None:
        out_dtype = compute_dtype

    N = Bsz * T
    tm = min(tm, _round_up(N, 128))
    Np = _round_up(N, tm)

    x2d = x.reshape(N, C)

    # Skinny LoRA-A contraction done once in XLA, bf16 operands + f32 accum.
    after_a = jnp.dot(x2d.astype(compute_dtype), A.T.astype(compute_dtype),
                      preferred_element_type=jnp.float32)

    x_p = _pad2d(x2d, Np, Cp).astype(compute_dtype)
    aa_p = _pad2d(after_a, Np, Rp).astype(jnp.float32)

    grid = (Np // tm, Op // tn, Cp // tk)

    out = pl.pallas_call(
        _lora_qkv_kernel,
        out_shape=jax.ShapeDtypeStruct((Np, Op), out_dtype),
        grid_spec=pltpu.PrefetchScalarGridSpec(
            num_scalar_prefetch=0,
            grid=grid,
            in_specs=[
                pl.BlockSpec((tm, tk), lambda i, j, k: (i, k)),   # x tile
                pl.BlockSpec((tk, tn), lambda i, j, k: (k, j)),   # W^T tile
                pl.BlockSpec((tm, Rp), lambda i, j, k: (i, 0)),   # after_a (k-invariant)
                pl.BlockSpec((Rp, tn), lambda i, j, k: (0, j)),   # (scaling*Bpad)^T
                pl.BlockSpec((1, tn), lambda i, j, k: (0, j)),    # bias row
            ],
            out_specs=pl.BlockSpec((tm, tn), lambda i, j, k: (i, j)),
            scratch_shapes=[pltpu.VMEM((tm, tn), jnp.float32)],
        ),
        compiler_params=pltpu.CompilerParams(
            dimension_semantics=("parallel", "parallel", "arbitrary")),
    )(x_p, prepared["wt"], aa_p, prepared["mt"], prepared["b"])

    return out[:N, :out_features].reshape(Bsz, T, out_features)


# -----------------------------------------------------------------------------
# Parameter construction (deterministic, mirrors LoRAQKVLinear.__init__)
# -----------------------------------------------------------------------------
def make_params(key, in_features, out_features, n_head, n_query_groups,
                r, lora_alpha, enable_lora):
    enable_q, enable_k, enable_v = enable_lora
    n_enabled = sum(enable_lora)
    kv_embd_size = in_features // (n_head // n_query_groups)
    qkv_shapes = [s for s in (in_features * enable_q,
                              kv_embd_size * enable_k,
                              kv_embd_size * enable_v) if s]
    scaling = lora_alpha / r

    q_per_kv = n_head // n_query_groups
    total_qkv = q_per_kv + 2
    head_size = out_features // (n_query_groups * total_qkv)
    ind = range(out_features)
    lora_ind = []
    if enable_q:
        lora_ind.extend([x for x in ind if x // head_size % total_qkv < total_qkv - 2])
    if enable_k:
        lora_ind.extend([x for x in ind if x // head_size % total_qkv == total_qkv - 2])
    if enable_v:
        lora_ind.extend([x for x in ind if x // head_size % total_qkv == total_qkv - 1])

    k1, k2, k3, k4 = jax.random.split(key, 4)
    W = jax.random.normal(k1, (out_features, in_features), jnp.float32) * 0.05
    bias = jax.random.normal(k2, (out_features,), jnp.float32) * 0.05
    bound = 1.0 / math.sqrt(in_features)
    lora_A = jax.random.uniform(k3, (r * n_enabled, in_features), jnp.float32,
                                -bound, bound)
    # NOTE: reference inits lora_B to zeros; we use random values so the LoRA
    # branch is actually exercised numerically.
    lora_B = jax.random.uniform(k4, (sum(qkv_shapes), r), jnp.float32, -0.5, 0.5)

    # Bpad (out_features, r * n_enabled): lora_B scattered block-diagonally onto
    # the enabled output columns (equivalent to conv1d-split + zero_pad).
    Bpad = np.zeros((out_features, r * n_enabled), dtype=np.float32)
    lora_B_np = np.asarray(lora_B)
    off = 0
    for bi, s in enumerate(qkv_shapes):
        rows = np.array(lora_ind[off:off + s])
        Bpad[rows, bi * r:(bi + 1) * r] = lora_B_np[off:off + s]
        off += s
    Bpad = jnp.asarray(Bpad)

    meta = dict(qkv_shapes=qkv_shapes, lora_ind=lora_ind, scaling=scaling, r=r,
                n_enabled=n_enabled)
    return W, bias, lora_A, lora_B, Bpad, meta


# -----------------------------------------------------------------------------
# Pure-JAX reference that follows the PyTorch code path literally
# -----------------------------------------------------------------------------
def reference_forward(x, W, bias, lora_A, lora_B, meta, out_features):
    pretrained = jnp.einsum("btc,oc->bto", x, W) + bias
    after_A = jnp.einsum("btc,rc->btr", x, lora_A)
    r = meta["r"]
    parts, off = [], 0
    for bi, s in enumerate(meta["qkv_shapes"]):
        B_i = lora_B[off:off + s]
        a_i = after_A[..., bi * r:(bi + 1) * r]
        parts.append(jnp.einsum("btr,sr->bts", a_i, B_i))   # conv1d k=1 == matmul
        off += s
    after_B = jnp.concatenate(parts, axis=-1)
    lora = jnp.zeros(x.shape[:-1] + (out_features,), x.dtype)
    lora = lora.at[..., jnp.array(meta["lora_ind"])].set(after_B)
    return pretrained + lora * meta["scaling"]


if __name__ == "__main__":
    # Small but tile-aligned configuration (exercises GQA split + zero_pad).
    batch, seq = 2, 256
    in_features = 256
    n_head, n_query_groups = 4, 2
    head_size = in_features // n_head                          # 64
    out_features = (n_head + 2 * n_query_groups) * head_size   # 512
    r, lora_alpha = 4, 8
    enable_lora = (True, False, True)      # query + value only

    key = jax.random.PRNGKey(0)
    kx, kp = jax.random.split(key)
    x = jax.random.normal(kx, (batch, seq, in_features), jnp.float32)

    W, bias, lora_A, lora_B, Bpad, meta = make_params(
        kp, in_features, out_features, n_head, n_query_groups,
        r, lora_alpha, enable_lora)

    ref = reference_forward(x, W, bias, lora_A, lora_B, meta, out_features)

    # 1) f32 compute path with small tiles: validates tiling / accumulation /
    #    k==0 epilogue exactly on a multi-tile (2, 2, 2) grid.
    prep_f32 = prepare_qkv_params(W, bias, Bpad, meta["scaling"],
                                  tn=256, tk=128, weight_dtype=jnp.float32)
    out_f32 = lora_qkv_forward(x, lora_A, prep_f32, tm=256,
                               compute_dtype=jnp.float32, out_dtype=jnp.float32)
    out_f32 = jax.block_until_ready(out_f32)
    np.testing.assert_allclose(np.asarray(out_f32), np.asarray(ref),
                               rtol=1e-5, atol=1e-4)

    # 2) default fast path: bf16 x/W with f32 accumulation, f32 LoRA operands,
    #    bf16 output, large (clamped) tiles.  Weight prep is done once.
    prep_bf16 = prepare_qkv_params(W, bias, Bpad, meta["scaling"])
    out_bf16 = lora_qkv_forward(x, lora_A, prep_bf16)
    out_bf16 = jax.block_until_ready(out_bf16)
    np.testing.assert_allclose(np.asarray(out_bf16.astype(jnp.float32)),
                               np.asarray(ref), rtol=5e-2, atol=5e-2)

    # TODO(synk): lora_dropout > 0 (training-mode dropout RNG) is not modeled; p=0.0 here.
    print("KERNEL_OK")
</pallas_src>

<mosaic_0001>
module attributes {stable_mosaic.version = 11 : i64} {
  func.func @_lora_qkv_kernel(%arg0: i32, %arg1: i32, %arg2: i32, %arg3: memref<256x128xf32, #tpu.memory_space<vmem>>, %arg4: memref<128x256xf32, #tpu.memory_space<vmem>>, %arg5: memref<256x128xf32, #tpu.memory_space<vmem>>, %arg6: memref<128x256xf32, #tpu.memory_space<vmem>>, %arg7: memref<1x256xf32, #tpu.memory_space<vmem>>, %arg8: memref<256x256xf32, #tpu.memory_space<vmem>>, %arg9: memref<256x256xf32, #tpu.memory_space<vmem>>) attributes {dimension_semantics = [#tpu.dimension_semantics<parallel>, #tpu.dimension_semantics<parallel>, #tpu.dimension_semantics<arbitrary>], iteration_bounds = array<i64: 2, 2, 2>, scalar_prefetch = 0 : i64, scratch_operands = 1 : i64, tpu.core_type = #tpu.core_type<tc>, window_params = [{transform_indices = @transform_0, window_bounds = array<i64: 256, 128>}, {transform_indices = @transform_1, window_bounds = array<i64: 128, 256>}, {transform_indices = @transform_2, window_bounds = array<i64: 256, 128>}, {transform_indices = @transform_3, window_bounds = array<i64: 128, 256>}, {transform_indices = @transform_4, window_bounds = array<i64: 1, 256>}, {transform_indices = @transform_5, window_bounds = array<i64: 256, 256>}]} {
    %c0_i32 = arith.constant 0 : i32
    %0 = arith.cmpi eq, %arg2, %c0_i32 : i32
    %1 = arith.extui %0 : i1 to i32
    %c0_i32_0 = arith.constant 0 : i32
    %2 = arith.cmpi ne, %1, %c0_i32_0 : i32
    scf.if %2 {
      %c0_9 = arith.constant 0 : index
      %c0_10 = arith.constant 0 : index
      %12 = vector.load %arg5[%c0_9, %c0_10] : memref<256x128xf32, #tpu.memory_space<vmem>>, vector<256x128xf32>
      %c0_11 = arith.constant 0 : index
      %c0_12 = arith.constant 0 : index
      %13 = vector.load %arg6[%c0_11, %c0_12] : memref<128x256xf32, #tpu.memory_space<vmem>>, vector<128x256xf32>
      %cst_13 = arith.constant dense<0.000000e+00> : vector<256x256xf32>
      %14 = tpu.matmul %12, %13, %cst_13 {dimension_numbers = #tpu.dot_dimension_numbers<[1], [0], [0], [1], [0, 0, 1, 1], [], []>} : vector<256x128xf32>, vector<128x256xf32>, vector<256x256xf32> -> vector<256x256xf32>
      %c0_14 = arith.constant 0 : index
      %c0_15 = arith.constant 0 : index
      %15 = vector.load %arg7[%c0_14, %c0_15] : memref<1x256xf32, #tpu.memory_space<vmem>>, vector<1x256xf32>
      %16 = vector.broadcast %15 : vector<1x256xf32> to vector<256x256xf32>
      %17 = arith.addf %14, %16 : vector<256x256xf32>
      %c0_16 = arith.constant 0 : index
      %c0_17 = arith.constant 0 : index
      %18 = vector.load %arg9[%c0_16, %c0_17] : memref<256x256xf32, #tpu.memory_space<vmem>>, vector<256x256xf32>
      tpu.vector_store %arg9[%c0_16, %c0_17], %17 {strides = array<i32>} : memref<256x256xf32, #tpu.memory_space<vmem>>, vector<256x256xf32>,
    } else {
    }
    %c0 = arith.constant 0 : index
    %c0_1 = arith.constant 0 : index
    %3 = vector.load %arg9[%c0, %c0_1] : memref<256x256xf32, #tpu.memory_space<vmem>>, vector<256x256xf32>
    %c0_2 = arith.constant 0 : index
    %c0_3 = arith.constant 0 : index
    %4 = vector.load %arg3[%c0_2, %c0_3] : memref<256x128xf32, #tpu.memory_space<vmem>>, vector<256x128xf32>
    %c0_4 = arith.constant 0 : index
    %c0_5 = arith.constant 0 : index
    %5 = vector.load %arg4[%c0_4, %c0_5] : memref<128x256xf32, #tpu.memory_space<vmem>>, vector<128x256xf32>
    %cst = arith.constant dense<0.000000e+00> : vector<256x256xf32>
    %6 = tpu.matmul %4, %5, %cst {dimension_numbers = #tpu.dot_dimension_numbers<[1], [0], [0], [1], [0, 0, 1, 1], [], []>} : vector<256x128xf32>, vector<128x256xf32>, vector<256x256xf32> -> vector<256x256xf32>
    %7 = arith.addf %3, %6 : vector<256x256xf32>
    %c0_6 = arith.constant 0 : index
    %c0_7 = arith.constant 0 : index
    %8 = vector.load %arg9[%c0_6, %c0_7] : memref<256x256xf32, #tpu.memory_space<vmem>>, vector<256x256xf32>
    tpu.vector_store %arg9[%c0_6, %c0_7], %7 {strides = array<i32>} : memref<256x256xf32, #tpu.memory_space<vmem>>, vector<256x256xf32>,
    %c1_i32 = arith.constant 1 : i32
    %9 = arith.cmpi eq, %arg2, %c1_i32 : i32
    %10 = arith.extui %9 : i1 to i32
    %c0_i32_8 = arith.constant 0 : i32
    %11 = arith.cmpi ne, %10, %c0_i32_8 : i32
    scf.if %11 {
      %c0_9 = arith.constant 0 : index
      %c0_10 = arith.constant 0 : index
      %12 = vector.load %arg9[%c0_9, %c0_10] : memref<256x256xf32, #tpu.memory_space<vmem>>, vector<256x256xf32>
      %c0_11 = arith.constant 0 : index
      %c0_12 = arith.constant 0 : index
      %13 = vector.load %arg8[%c0_11, %c0_12] : memref<256x256xf32, #tpu.memory_space<vmem>>, vector<256x256xf32>
      tpu.vector_store %arg8[%c0_11, %c0_12], %12 {strides = array<i32>} : memref<256x256xf32, #tpu.memory_space<vmem>>, vector<256x256xf32>,
    } else {
    }
    return
  }
  func.func @transform_0(%arg0: i32, %arg1: i32, %arg2: i32) -> (i32, i32) {
    %c0_i32 = arith.constant 0 : i32
    return %arg0, %arg2 : i32, i32
  }
  func.func @transform_1(%arg0: i32, %arg1: i32, %arg2: i32) -> (i32, i32) {
    %c0_i32 = arith.constant 0 : i32
    return %arg2, %arg1 : i32, i32
  }
  func.func @transform_2(%arg0: i32, %arg1: i32, %arg2: i32) -> (i32, i32) {
    %c0_i32 = arith.constant 0 : i32
    %c0_i32_0 = arith.constant 0 : i32
    return %arg0, %c0_i32 : i32, i32
  }
  func.func @transform_3(%arg0: i32, %arg1: i32, %arg2: i32) -> (i32, i32) {
    %c0_i32 = arith.constant 0 : i32
    %c0_i32_0 = arith.constant 0 : i32
    return %c0_i32, %arg1 : i32, i32
  }
  func.func @transform_4(%arg0: i32, %arg1: i32, %arg2: i32) -> (i32, i32) {
    %c0_i32 = arith.constant 0 : i32
    %c0_i32_0 = arith.constant 0 : i32
    return %c0_i32, %arg1 : i32, i32
  }
  func.func @transform_5(%arg0: i32, %arg1: i32, %arg2: i32) -> (i32, i32) {
    %c0_i32 = arith.constant 0 : i32
    return %arg0, %arg1 : i32, i32
  }
}

</mosaic_0001>

<llo_original>
// kernel: tpu_custom_call.1
$region0: #{tpu_custom_call.1}
  #allocation0 [shape = 'u32[]', space=smem, size = 0x4, offset = 0x4, fixed_abs, tag = 'smem constant byte address 0x4 - core index']
  #allocation1 [shape = 'u32[144,128]{1,0:T(1,128)}', space=vmem, size = 0x12000, scoped, tag = 'internal scratch']
  #allocation2 [shape = 'f32[256,256]{1,0:T(8,128)}', space=vmem, size = 0x40000, scoped, tag = 'scratch operand']
  %s0 = inlined_call_operand.hbm [shape: f32[512,256], index: 0, kind: input, shape index: {}]
  %s1 = inlined_call_operand.hbm [shape: f32[256,512], index: 1, kind: input, shape index: {}]
  %s2 = inlined_call_operand.hbm [shape: f32[512,128], index: 2, kind: input, shape index: {}]
  %s3 = inlined_call_operand.hbm [shape: f32[128,512], index: 3, kind: input, shape index: {}]
  %s4 = inlined_call_operand.vmem [shape: f32[1,512], index: 4, kind: input, shape index: {}]
  %s5 = inlined_call_operand.hbm [shape: f32[512,512], index: 5, kind: output, shape index: {}]
  %s6 = sld [smem:[#allocation0]]
  $region77: #{tpu_custom_call.1} parent=0
    _
  %s8 = ssub.s32 1, %s6
  %s9 = scalar_select 0, %s8, %s6
  $region1: #{tpu_custom_call.1} parent=0
    #allocation3 [shape = 'u8[262144]{0}', space=vmem, size = 0x40000, scoped, tag = 'input window, operand 0']
    #allocation4 [shape = 's32[2]{0}', space=sflag, size = 0x8, scoped, tag = 'scoped memory for tpu_custom_call.1']
    #allocation5 [shape = 's32[2]{0}', space=sflag, size = 0x8, scoped, tag = 'scoped memory for tpu_custom_call.1']
    #allocation6 [shape = 'u8[262144]{0}', space=vmem, size = 0x40000, scoped, tag = 'input window, operand 1']
    #allocation7 [shape = 's32[2]{0}', space=sflag, size = 0x8, scoped, tag = 'scoped memory for tpu_custom_call.1']
    #allocation8 [shape = 'u8[262144]{0}', space=vmem, size = 0x40000, scoped, tag = 'input window, operand 2']
    #allocation9 [shape = 'u8[262144]{0}', space=vmem, size = 0x40000, scoped, tag = 'input window, operand 3']
    #allocation10 [shape = 's32[2]{0}', space=sflag, size = 0x8, scoped, tag = 'scoped memory for tpu_custom_call.1']
    #allocation11 [shape = 'u8[524288]{0}', space=vmem, size = 0x80000, scoped, tag = 'output window, operand 0']
    %10 = vsyncpa [#allocation4], 0
    %s11 = scalar_lea.sflag [#allocation4], 1
    %12 = vsyncpa %s11, 0
    %13 = vsyncpa [#allocation7], 0
    %s14 = scalar_lea.sflag [#allocation7], 1
    %15 = vsyncpa %s14, 0
    %16 = vsyncpa [#allocation10], 0
    %s17 = scalar_lea.sflag [#allocation10], 1
    %18 = vsyncpa %s17, 0
    %19 = vsyncpa [#allocation5], 0
    %s20 = scalar_lea.sflag [#allocation5], 1
    %21 = vsyncpa %s20, 0
    loop: start=0, step=1, limit=10
    $region2: #{tpu_custom_call.1} parent=1 // loop_pre_header
      _
    $region3: #{tpu_custom_call.1} parent=1 // loop_header
      %s23 = sphi 0, %s27
      %p24 = scmp.ge.s32.totalorder %s23, 10
      %s30 = sphi 0, %s49
      %s31 = sphi 0, %s45
      %s32 = sphi 0, %s41
      %s33 = sphi 0, %s30
      %s34 = sphi 0, %s31
      %s35 = sphi 0, %s32
      %s36 = sphi 0, %s33
      %s37 = sphi 0, %s34
      %s38 = sphi 0, %s35
      %s54 = sphi 0, %s56
      %s57 = sphi 0, %s54
      %s58 = sphi 0, %s57
      %s74 = sphi 0, %s58
      %s82 = sphi 0, %s84
      %s85 = sphi 0, %s82
      %s86 = sphi 0, %s85
      %s102 = sphi 0, %s86
      %s108 = sphi 0, %s110
      %s111 = sphi 0, %s108
      %s112 = sphi 0, %s111
      %s128 = sphi 0, %s112
      %s134 = sphi 0, %s136
      %s137 = sphi 0, %s134
      %s138 = sphi 0, %s137
      %s154 = sphi 0, %s138
      %s160 = sphi 0, %s162
      %s163 = sphi 0, %s160
      %s164 = sphi 0, %s163
      %s180 = sphi 0, %s164
      %s188 = sphi 0, %s190
      %s191 = sphi 0, %s188
      %s192 = sphi 0, %s191
      %s208 = sphi 0, %s192
    $region4: #{tpu_custom_call.1} parent=1 // loop_header_branch
      %26 = sbr.rel (%p24) target = $region8
    $region5: #{tpu_custom_call.1} parent=1 // loop_body
      %s28 = ssub.s32 %s23, 1
      %s29 = ssub.s32 %s23, 2
      %s39 = sadd.s32 1, %s32
      %p40 = scmp.ge.s32.totalorder %s39, 2
      %s41 = scalar_select %p40, 0, %s39
      %s42 = sadd.s32 1, %s31
      %s43 = scalar_select %p40, %s42, %s31
      %p44 = scmp.ge.s32.totalorder %s43, 2
      %s45 = scalar_select %p44, 0, %s43
      %s46 = sadd.s32 1, %s30
      %s47 = scalar_select %p44, %s46, %s30
      %p48 = scmp.ge.s32.totalorder %s47, 2
      %s49 = scalar_select %p48, 0, %s47
      %s50 = ssub.s32 %s30, %s49
      %s51 = ssub.s32 %s32, %s41
      %s52 = sor.u32 %s50, %s51
      %p53 = scmp.eq.s32.totalorder %s52, 0
      %s55 = sadd.s32 %s54, 1
      %s56 = scalar_select %p53, %s54, %s55
      %p59 = pneg %p53
      %p60 = scmp.eq.s32.totalorder %s23, 7
      %p61 = por %p59, %p60
      %p62 = scmp.ne.s32.totalorder %s54, %s57
      %p63 = scmp.eq.s32.totalorder %s23, 0
      %p64 = por %p62, %p63
      %p65 = scmp.ne.s32.totalorder %s54, %s57
      %p66 = scmp.eq.s32.totalorder %s28, 7
      %p67 = por %p65, %p66
      %p68 = scmp.ne.s32.totalorder %s57, %s58
      %p69 = scmp.eq.s32.totalorder %s28, 0
      %p70 = por %p68, %p69
      %p71 = scmp.ne.s32.totalorder %s57, %s58
      %p72 = scmp.eq.s32.totalorder %s29, 7
      %p73 = por %p71, %p72
      %p75 = scmp.ne.s32.totalorder %s58, %s74
      %p76 = scmp.eq.s32.totalorder %s29, 0
      %p77 = por %p75, %p76
      %s78 = ssub.s32 %s32, %s41
      %s79 = ssub.s32 %s31, %s45
      %s80 = sor.u32 %s78, %s79
      %p81 = scmp.eq.s32.totalorder %s80, 0
      %s83 = sadd.s32 %s82, 1
      %s84 = scalar_select %p81, %s82, %s83
      %p87 = pneg %p81
      %p88 = scmp.eq.s32.totalorder %s23, 7
      %p89 = por %p87, %p88
      %p90 = scmp.ne.s32.totalorder %s82, %s85
      %p91 = scmp.eq.s32.totalorder %s23, 0
      %p92 = por %p90, %p91
      %p93 = scmp.ne.s32.totalorder %s82, %s85
      %p94 = scmp.eq.s32.totalorder %s28, 7
      %p95 = por %p93, %p94
      %p96 = scmp.ne.s32.totalorder %s85, %s86
      %p97 = scmp.eq.s32.totalorder %s28, 0
      %p98 = por %p96, %p97
      %p99 = scmp.ne.s32.totalorder %s85, %s86
      %p100 = scmp.eq.s32.totalorder %s29, 7
      %p101 = por %p99, %p100
      %p103 = scmp.ne.s32.totalorder %s86, %s102
      %p104 = scmp.eq.s32.totalorder %s29, 0
      %p105 = por %p103, %p104
      %s106 = ssub.s32 %s30, %s49
      %p107 = scmp.eq.s32.totalorder %s106, 0
      %s109 = sadd.s32 %s108, 1
      %s110 = scalar_select %p107, %s108, %s109
      %p113 = pneg %p107
      %p114 = scmp.eq.s32.totalorder %s23, 7
      %p115 = por %p113, %p114
      %p116 = scmp.ne.s32.totalorder %s108, %s111
      %p117 = scmp.eq.s32.totalorder %s23, 0
      %p118 = por %p116, %p117
      %p119 = scmp.ne.s32.totalorder %s108, %s111
      %p120 = scmp.eq.s32.totalorder %s28, 7
      %p121 = por %p119, %p120
      %p122 = scmp.ne.s32.totalorder %s111, %s112
      %p123 = scmp.eq.s32.totalorder %s28, 0
      %p124 = por %p122, %p123
      %p125 = scmp.ne.s32.totalorder %s111, %s112
      %p126 = scmp.eq.s32.totalorder %s29, 7
      %p127 = por %p125, %p126
      %p129 = scmp.ne.s32.totalorder %s112, %s128
      %p130 = scmp.eq.s32.totalorder %s29, 0
      %p131 = por %p129, %p130
      %s132 = ssub.s32 %s31, %s45
      %p133 = scmp.eq.s32.totalorder %s132, 0
      %s135 = sadd.s32 %s134, 1
      %s136 = scalar_select %p133, %s134, %s135
      %p139 = pneg %p133
      %p140 = scmp.eq.s32.totalorder %s23, 7
      %p141 = por %p139, %p140
      %p142 = scmp.ne.s32.totalorder %s134, %s137
      %p143 = scmp.eq.s32.totalorder %s23, 0
      %p144 = por %p142, %p143
      %p145 = scmp.ne.s32.totalorder %s134, %s137
      %p146 = scmp.eq.s32.totalorder %s28, 7
      %p147 = por %p145, %p146
      %p148 = scmp.ne.s32.totalorder %s137, %s138
      %p149 = scmp.eq.s32.totalorder %s28, 0
      %p150 = por %p148, %p149
      %p151 = scmp.ne.s32.totalorder %s137, %s138
      %p152 = scmp.eq.s32.totalorder %s29, 7
      %p153 = por %p151, %p152
      %p155 = scmp.ne.s32.totalorder %s138, %s154
      %p156 = scmp.eq.s32.totalorder %s29, 0
      %p157 = por %p155, %p156
      %s158 = ssub.s32 %s31, %s45
      %p159 = scmp.eq.s32.totalorder %s158, 0
      %s161 = sadd.s32 %s160, 1
      %s162 = scalar_select %p159, %s160, %s161
      %p165 = pneg %p159
      %p166 = scmp.eq.s32.totalorder %s23, 7
      %p167 = por %p165, %p166
      %p168 = scmp.ne.s32.totalorder %s160, %s163
      %p169 = scmp.eq.s32.totalorder %s23, 0
      %p170 = por %p168, %p169
      %p171 = scmp.ne.s32.totalorder %s160, %s163
      %p172 = scmp.eq.s32.totalorder %s28, 7
      %p173 = por %p171, %p172
      %p174 = scmp.ne.s32.totalorder %s163, %s164
      %p175 = scmp.eq.s32.totalorder %s28, 0
      %p176 = por %p174, %p175
      %p177 = scmp.ne.s32.totalorder %s163, %s164
      %p178 = scmp.eq.s32.totalorder %s29, 7
      %p179 = por %p177, %p178
      %p181 = scmp.ne.s32.totalorder %s164, %s180
      %p182 = scmp.eq.s32.totalorder %s29, 0
      %p183 = por %p181, %p182
      %s184 = ssub.s32 %s30, %s49
      %s185 = ssub.s32 %s31, %s45
      %s186 = sor.u32 %s184, %s185
      %p187 = scmp.eq.s32.totalorder %s186, 0
      %s189 = sadd.s32 %s188, 1
      %s190 = scalar_select %p187, %s188, %s189
      %p193 = pneg %p187
      %p194 = scmp.eq.s32.totalorder %s23, 7
      %p195 = por %p193, %p194
      %p196 = scmp.ne.s32.totalorder %s188, %s191
      %p197 = scmp.eq.s32.totalorder %s23, 0
      %p198 = por %p196, %p197
      %p199 = scmp.ne.s32.totalorder %s188, %s191
      %p200 = scmp.eq.s32.totalorder %s28, 7
      %p201 = por %p199, %p200
      %p202 = scmp.ne.s32.totalorder %s191, %s192
      %p203 = scmp.eq.s32.totalorder %s28, 0
      %p204 = por %p202, %p203
      %p205 = scmp.ne.s32.totalorder %s191, %s192
      %p206 = scmp.eq.s32.totalorder %s29, 7
      %p207 = por %p205, %p206
      %p209 = scmp.ne.s32.totalorder %s192, %s208
      %p210 = scmp.eq.s32.totalorder %s29, 0
      %p211 = por %p209, %p210
      %p212 = scmp.le.s32.totalorder 1, %s23
      %p213 = scmp.lt.s32.totalorder %s23, 9
      %p214 = pnand %p212, %p213
      %p215 = pneg %p214
      // Predicated region
      $region9: #{tpu_custom_call.1} parent=5 // pred_check
        _
      $region10: #{tpu_custom_call.1} parent=5 // pred_check_branch
        %217 = sbr.rel (%p214) target = $region12
      $region11: #{tpu_custom_call.1} parent=5 // pred_region
        %s218 = ssub.s32 %s23, 1
      $region12: #{tpu_custom_call.1} parent=5 // pred_fallthru
        _
      %p219 = scmp.lt.s32.totalorder %s23, 8
      // Predicated region
      $region13: #{tpu_custom_call.1} parent=5 // pred_check
        %p220 = pneg %p219
      $region14: #{tpu_custom_call.1} parent=5 // pred_check_branch
        %222 = sbr.rel (%p220) target = $region16
      $region15: #{tpu_custom_call.1} parent=5 // pred_region
        // Predicated region
        $region17: #{tpu_custom_call.1} parent=15 // pred_check
          %p223 = pneg %p64
        $region18: #{tpu_custom_call.1} parent=15 // pred_check_branch
          %225 = sbr.rel (%p223) target = $region20
        $region19: #{tpu_custom_call.1} parent=15 // pred_region
          %s226 = sand.u32 %s54, 1
          %s227 = scalar_lea.sflag [#allocation4], %s226
          %s228 = sand.u32 %s54, 1
          %s229 = smul.addr %s228, 256
          %s230 = scalar_lea.vmem [#allocation3], %s229
          %s231 = smul.u32 32, %s30
          %s233 = ssub.s32 4096, 4096
          %234 = vsyncadd %s227, %s233
          %s235 = smul.addr %s231, 2
          %s236 = sadd.s32 %s32, %s235
          %s237 = smul.addr %s236, 128
          %s238 = scalar_lea.hbm %s0, %s237
          %s239 = sshll.u32 %s230, 4
          %s240 = int_to_ptr.vmem [resolvable:$true] %s239
          %245 = dma.hbm_to_vmem [thread:$0]  %s238, 4096, %s240, %s227, 256, 128, 8
        $region20: #{tpu_custom_call.1} parent=15 // pred_fallthru
          _
        // Predicated region
        $region21: #{tpu_custom_call.1} parent=15 // pred_check
          %p246 = pneg %p92
        $region22: #{tpu_custom_call.1} parent=15 // pred_check_branch
          %248 = sbr.rel (%p246) target = $region24
        $region23: #{tpu_custom_call.1} parent=15 // pred_region
          %s249 = sand.u32 %s23, 1
          %s250 = scalar_lea.sflag [#allocation7], %s249
          %s251 = sand.u32 %s82, 1
          %s252 = smul.addr %s251, 256
          %s253 = scalar_lea.vmem [#allocation6], %s252
          %s254 = smul.u32 16, %s32
          %s255 = smul.u32 2, %s31
          %s257 = ssub.s32 4096, 4096
          %258 = vsyncadd %s250, %s257
          %s259 = smul.addr %s254, 4
          %s260 = sadd.s32 %s255, %s259
          %s261 = smul.addr %s260, 128
          %s262 = scalar_lea.hbm %s1, %s261
          %s263 = sshll.u32 %s253, 4
          %s264 = int_to_ptr.vmem [resolvable:$true] %s263
          %269 = dma.hbm_to_vmem [thread:$0]  %s262, 4096, %s264, %s250, 512, 256, 16
        $region24: #{tpu_custom_call.1} parent=15 // pred_fallthru
          _
        // Predicated region
        $region25: #{tpu_custom_call.1} parent=15 // pred_check
          %p270 = pneg %p118
        $region26: #{tpu_custom_call.1} parent=15 // pred_check_branch
          %272 = sbr.rel (%p270) target = $region28
        $region27: #{tpu_custom_call.1} parent=15 // pred_region
          %s273 = sand.u32 %s23, 1
          %s274 = scalar_lea.sflag [#allocation7], %s273
          %s275 = sand.u32 %s108, 1
          %s276 = smul.addr %s275, 256
          %s277 = scalar_lea.vmem [#allocation8], %s276
          %s278 = smul.u32 32, %s30
          %s280 = ssub.s32 4096, 4096
          %281 = vsyncadd %s274, %s280
          %s282 = smul.addr %s278, 128
          %s283 = scalar_lea.hbm %s2, %s282
          %s284 = sshll.u32 %s277, 4
          %s285 = int_to_ptr.vmem [resolvable:$true] %s284
          %290 = dma.hbm_to_vmem [thread:$0]  %s283, 4096, %s285, %s274, 128, 128, 8
        $region28: #{tpu_custom_call.1} parent=15 // pred_fallthru
          _
        // Predicated region
        $region29: #{tpu_custom_call.1} parent=15 // pred_check
          %p291 = pneg %p144
        $region30: #{tpu_custom_call.1} parent=15 // pred_check_branch
          %293 = sbr.rel (%p291) target = $region32
        $region31: #{tpu_custom_call.1} parent=15 // pred_region
          %s294 = sand.u32 %s134, 1
          %s295 = scalar_lea.sflag [#allocation10], %s294
          %s296 = sand.u32 %s134, 1
          %s297 = smul.addr %s296, 256
          %s298 = scalar_lea.vmem [#allocation9], %s297
          %s299 = smul.u32 2, %s31
          %s301 = ssub.s32 4096, 4096
          %302 = vsyncadd %s295, %s301
          %s303 = smul.addr %s299, 128
          %s304 = scalar_lea.hbm %s3, %s303
          %s305 = sshll.u32 %s298, 4
          %s306 = int_to_ptr.vmem [resolvable:$true] %s305
          %311 = dma.hbm_to_vmem [thread:$0]  %s304, 4096, %s306, %s295, 512, 256, 16
        $region32: #{tpu_custom_call.1} parent=15 // pred_fallthru
          _
        // Predicated region
        $region33: #{tpu_custom_call.1} parent=15 // pred_check
          %p312 = pneg %p170
        $region34: #{tpu_custom_call.1} parent=15 // pred_check_branch
          %314 = sbr.rel (%p312) target = $region36
        $region35: #{tpu_custom_call.1} parent=15 // pred_region
          %s315 = smul.u32 2, %s31
          %p316 = scmp.lt.s32.totalorder %s315, 3
          %s317 = scalar_select %p316, %s315, 3
          %s318 = scalar_lea.vmem %s4, %s317
          %s319 = smul.u32 2, %s31
        $region36: #{tpu_custom_call.1} parent=15 // pred_fallthru
          _
      $region16: #{tpu_custom_call.1} parent=5 // pred_fallthru
        _
      %p320 = scmp.le.s32.totalorder 1, %s23
      %p321 = scmp.lt.s32.totalorder %s23, 9
      %p322 = pnand %p320, %p321
      %p323 = pneg %p322
      // Predicated region
      $region37: #{tpu_custom_call.1} parent=5 // pred_check
        _
      $region38: #{tpu_custom_call.1} parent=5 // pred_check_branch
        %325 = sbr.rel (%p322) target = $region40
      $region39: #{tpu_custom_call.1} parent=5 // pred_region
        %s326 = ssub.s32 %s23, 1
        %s327 = sand.u32 %s57, 1
        %s328 = scalar_lea.sflag [#allocation4], %s327
        %s329 = sand.u32 %s57, 1
        %s330 = smul.addr %s329, 256
        %s331 = scalar_lea.vmem [#allocation3], %s330
        // Predicated region
        $region41: #{tpu_custom_call.1} parent=39 // pred_check
          %p332 = pneg %p70
        $region42: #{tpu_custom_call.1} parent=39 // pred_check_branch
          %334 = sbr.rel (%p332) target = $region44
        $region43: #{tpu_custom_call.1} parent=39 // pred_region
          %335 = dma.done %s328, 4096
        $region44: #{tpu_custom_call.1} parent=39 // pred_fallthru
          _
        %s336 = sand.u32 %s28, 1
        %s337 = scalar_lea.sflag [#allocation7], %s336
        %s338 = sand.u32 %s85, 1
        %s339 = smul.addr %s338, 256
        %s340 = scalar_lea.vmem [#allocation6], %s339
        // Predicated region
        $region45: #{tpu_custom_call.1} parent=39 // pred_check
          %p341 = pneg %p98
        $region46: #{tpu_custom_call.1} parent=39 // pred_check_branch
          %343 = sbr.rel (%p341) target = $region48
        $region47: #{tpu_custom_call.1} parent=39 // pred_region
          %344 = dma.done %s337, 4096
        $region48: #{tpu_custom_call.1} parent=39 // pred_fallthru
          _
        %s345 = sand.u32 %s28, 1
        %s346 = scalar_lea.sflag [#allocation7], %s345
        %s347 = sand.u32 %s111, 1
        %s348 = smul.addr %s347, 256
        %s349 = scalar_lea.vmem [#allocation8], %s348
        // Predicated region
        $region49: #{tpu_custom_call.1} parent=39 // pred_check
          %p350 = pneg %p124
        $region50: #{tpu_custom_call.1} parent=39 // pred_check_branch
          %352 = sbr.rel (%p350) target = $region52
        $region51: #{tpu_custom_call.1} parent=39 // pred_region
          %353 = dma.done %s346, 4096
        $region52: #{tpu_custom_call.1} parent=39 // pred_fallthru
          _
        %s354 = sand.u32 %s137, 1
        %s355 = scalar_lea.sflag [#allocation10], %s354
        %s356 = sand.u32 %s137, 1
        %s357 = smul.addr %s356, 256
        %s358 = scalar_lea.vmem [#allocation9], %s357
        // Predicated region
        $region53: #{tpu_custom_call.1} parent=39 // pred_check
          %p359 = pneg %p150
        $region54: #{tpu_custom_call.1} parent=39 // pred_check_branch
          %361 = sbr.rel (%p359) target = $region56
        $region55: #{tpu_custom_call.1} parent=39 // pred_region
          %362 = dma.done %s355, 4096
        $region56: #{tpu_custom_call.1} parent=39 // pred_fallthru
          _
        %s363 = sand.u32 %s57, 1
        %s364 = scalar_lea.sflag [#allocation4], %s363
        %s365 = sand.u32 %s57, 1
        %s366 = smul.addr %s365, 256
        %s367 = scalar_lea.vmem [#allocation3], %s366
        %p368 = pneg %p70
        %p369 = pneg %p67
        %s370 = sand.u32 %s28, 1
        %s371 = scalar_lea.sflag [#allocation7], %s370
        %s372 = sand.u32 %s85, 1
        %s373 = smul.addr %s372, 256
        %s374 = scalar_lea.vmem [#allocation6], %s373
        %p375 = pneg %p98
        %p376 = pneg %p95
        %s377 = sand.u32 %s28, 1
        %s378 = scalar_lea.sflag [#allocation7], %s377
        %s379 = sand.u32 %s111, 1
        %s380 = smul.addr %s379, 256
        %s381 = scalar_lea.vmem [#allocation8], %s380
        %p382 = pneg %p124
        %p383 = pneg %p121
        %s384 = sand.u32 %s137, 1
        %s385 = scalar_lea.sflag [#allocation10], %s384
        %s386 = sand.u32 %s137, 1
        %s387 = smul.addr %s386, 256
        %s388 = scalar_lea.vmem [#allocation9], %s387
        %p389 = pneg %p150
        %p390 = pneg %p147
        %s391 = smul.u32 2, %s34
        %p392 = scmp.lt.s32.totalorder %s391, 3
        %s393 = scalar_select %p392, %s391, 3
        %s394 = scalar_lea.vmem %s4, %s393
        %p395 = pneg %p176
        %p396 = pneg %p173
        %p397 = pneg %p204
        %p398 = pneg %p201
        %s399 = sand.u32 %s191, 1
        %s400 = scalar_lea.sflag [#allocation5], %s399
        %s401 = sand.u32 %s191, 1
        %s402 = smul.addr %s401, 512
        %s403 = scalar_lea.vmem [#allocation11], %s402
        %s404 = smul.u32 32, %s33
        %s405 = smul.u32 16, %s35
        %s406 = smul.u32 2, %s34
        %s407 = smul.u32 32, %s33
        %s408 = smul.u32 2, %s34
        %s409 = smul.u32 2, %s34
        %p410 = scmp.lt.s32.totalorder %s409, 3
        %s411 = scalar_select %p410, %s409, 3
        %s412 = scalar_lea.vmem %s4, %s411
        %s413 = smul.u32 2, %s34
        %s414 = smul.u32 32, %s33
        %s415 = smul.u32 2, %s34
        %p416 = scmp.eq.s32.totalorder %s35, 0
        // Predicated region
        $region57: #{tpu_custom_call.1} parent=39 // pred_check
          %p417 = pneg %p416
        $region58: #{tpu_custom_call.1} parent=39 // pred_check_branch
          %419 = sbr.rel (%p417) target = $region60
        $region59: #{tpu_custom_call.1} parent=39 // pred_region
          %v420 = vld [vmem:[%s349] sm:$0xff]
          %v421 = vld [vmem:[%s349 + $0x8] sm:$0xff]
          %v422 = vld [vmem:[%s349 + $0x10] sm:$0xff]
          %v423 = vld [vmem:[%s349 + $0x18] sm:$0xff]
          %v424 = vld [vmem:[%s349 + $0x20] sm:$0xff]
          %v425 = vld [vmem:[%s349 + $0x28] sm:$0xff]
          %v426 = vld [vmem:[%s349 + $0x30] sm:$0xff]
          %v427 = vld [vmem:[%s349 + $0x38] sm:$0xff]
          %v428 = vld [vmem:[%s349 + $0x40] sm:$0xff]
          %v429 = vld [vmem:[%s349 + $0x48] sm:$0xff]
          %v430 = vld [vmem:[%s349 + $0x50] sm:$0xff]
          %v431 = vld [vmem:[%s349 + $0x58] sm:$0xff]
          %v432 = vld [vmem:[%s349 + $0x60] sm:$0xff]
          %v433 = vld [vmem:[%s349 + $0x68] sm:$0xff]
          %v434 = vld [vmem:[%s349 + $0x70] sm:$0xff]
          %v435 = vld [vmem:[%s349 + $0x78] sm:$0xff]
          %v436 = vld [vmem:[%s349 + $0x80] sm:$0xff]
          %v437 = vld [vmem:[%s349 + $0x88] sm:$0xff]
          %v438 = vld [vmem:[%s349 + $0x90] sm:$0xff]
          %v439 = vld [vmem:[%s349 + $0x98] sm:$0xff]
          %v440 = vld [vmem:[%s349 + $0xa0] sm:$0xff]
          %v441 = vld [vmem:[%s349 + $0xa8] sm:$0xff]
          %v442 = vld [vmem:[%s349 + $0xb0] sm:$0xff]
          %v443 = vld [vmem:[%s349 + $0xb8] sm:$0xff]
          %v444 = vld [vmem:[%s349 + $0xc0] sm:$0xff]
          %v445 = vld [vmem:[%s349 + $0xc8] sm:$0xff]
          %v446 = vld [vmem:[%s349 + $0xd0] sm:$0xff]
          %v447 = vld [vmem:[%s349 + $0xd8] sm:$0xff]
          %v448 = vld [vmem:[%s349 + $0xe0] sm:$0xff]
          %v449 = vld [vmem:[%s349 + $0xe8] sm:$0xff]
          %v450 = vld [vmem:[%s349 + $0xf0] sm:$0xff]
          %v451 = vld [vmem:[%s349 + $0xf8] sm:$0xff]
          %v452 = vld [vmem:[%s358] sm:$0xff]
          %v453 = vld [vmem:[%s358 + $0x8] sm:$0xff]
          %v454 = vld [vmem:[%s358 + $0x10] sm:$0xff]
          %v455 = vld [vmem:[%s358 + $0x18] sm:$0xff]
          %v456 = vld [vmem:[%s358 + $0x20] sm:$0xff]
          %v457 = vld [vmem:[%s358 + $0x28] sm:$0xff]
          %v458 = vld [vmem:[%s358 + $0x30] sm:$0xff]
          %v459 = vld [vmem:[%s358 + $0x38] sm:$0xff]
          %v460 = vld [vmem:[%s358 + $0x40] sm:$0xff]
          %v461 = vld [vmem:[%s358 + $0x48] sm:$0xff]
          %v462 = vld [vmem:[%s358 + $0x50] sm:$0xff]
          %v463 = vld [vmem:[%s358 + $0x58] sm:$0xff]
          %v464 = vld [vmem:[%s358 + $0x60] sm:$0xff]
          %v465 = vld [vmem:[%s358 + $0x68] sm:$0xff]
          %v466 = vld [vmem:[%s358 + $0x70] sm:$0xff]
          %v467 = vld [vmem:[%s358 + $0x78] sm:$0xff]
          %v468 = vld [vmem:[%s358 + $0x80] sm:$0xff]
          %v469 = vld [vmem:[%s358 + $0x88] sm:$0xff]
          %v470 = vld [vmem:[%s358 + $0x90] sm:$0xff]
          %v471 = vld [vmem:[%s358 + $0x98] sm:$0xff]
          %v472 = vld [vmem:[%s358 + $0xa0] sm:$0xff]
          %v473 = vld [vmem:[%s358 + $0xa8] sm:$0xff]
          %v474 = vld [vmem:[%s358 + $0xb0] sm:$0xff]
          %v475 = vld [vmem:[%s358 + $0xb8] sm:$0xff]
          %v476 = vld [vmem:[%s358 + $0xc0] sm:$0xff]
          %v477 = vld [vmem:[%s358 + $0xc8] sm:$0xff]
          %v478 = vld [vmem:[%s358 + $0xd0] sm:$0xff]
          %v479 = vld [vmem:[%s358 + $0xd8] sm:$0xff]
          %v480 = vld [vmem:[%s358 + $0xe0] sm:$0xff]
          %v481 = vld [vmem:[%s358 + $0xe8] sm:$0xff]
          %v482 = vld [vmem:[%s358 + $0xf0] sm:$0xff]
          %v483 = vld [vmem:[%s358 + $0xf8] sm:$0xff]
          %v484 = vld [vmem:[%s412] sm:$0x3]
          %v486 = vlaneseq
          %v487 = vshrl.u32 %v486, 7
          %v488 = vsub.s32 0, %v487
          %v489 = vrot.slane %v484, %v488
          %v490 = vlaneseq
          %v491 = vshrl.u32 %v490, 7
          %v492 = vsub.s32 1, %v491
          %v493 = vrot.slane %v484, %v492
          %496 = vmatprep.subr.mxu0 %v453
          %497 = vmatpush1.msra.mxu0 %v452
          %498 = vmatprep.subr.mxu0 %v455
          %499 = vmatpush1.msra.mxu0 %v454
          %500 = vmatprep.subr.mxu0 %v457
          %501 = vmatpush1.msra.mxu0 %v456
          %502 = vmatprep.subr.mxu0 %v459
          %503 = vmatpush1.msra.mxu0 %v458
          %504 = vmatprep.subr.mxu0 %v461
          %505 = vmatpush1.msra.mxu0 %v460
          %506 = vmatprep.subr.mxu0 %v463
          %507 = vmatpush1.msra.mxu0 %v462
          %508 = vmatprep.subr.mxu0 %v465
          %509 = vmatpush1.msra.mxu0 %v464
          %510 = vmatprep.subr.mxu0 %v467
          %511 = vmatpush1.msra.mxu0 %v466
          %512 = vmatprep.subr.mxu0 %v469
          %513 = vmatpush1.msra.mxu0 %v468
          %514 = vmatprep.subr.mxu0 %v471
          %515 = vmatpush1.msra.mxu0 %v470
          %516 = vmatprep.subr.mxu0 %v473
          %517 = vmatpush1.msra.mxu0 %v472
          %518 = vmatprep.subr.mxu0 %v475
          %519 = vmatpush1.msra.mxu0 %v474
          %520 = vmatprep.subr.mxu0 %v477
          %521 = vmatpush1.msra.mxu0 %v476
          %522 = vmatprep.subr.mxu0 %v479
          %523 = vmatpush1.msra.mxu0 %v478
          %524 = vmatprep.subr.mxu0 %v481
          %525 = vmatpush1.msra.mxu0 %v480
          %526 = vmatprep.subr.mxu0 %v483
          %527 = vmatpush1.msra.mxu0 %v482
          %528 = vmatprep.subr.mxu0 0.0
          %529 = vmatpush1.msra.mxu0 0.0
          %530 = vmatprep.subr.mxu0 0.0
          %531 = vmatpush1.msra.mxu0 0.0
          %532 = vmatprep.subr.mxu0 0.0
          %533 = vmatpush1.msra.mxu0 0.0
          %534 = vmatprep.subr.mxu0 0.0
          %535 = vmatpush1.msra.mxu0 0.0
          %536 = vmatprep.subr.mxu0 0.0
          %537 = vmatpush1.msra.mxu0 0.0
          %538 = vmatprep.subr.mxu0 0.0
          %539 = vmatpush1.msra.mxu0 0.0
          %540 = vmatprep.subr.mxu0 0.0
          %541 = vmatpush1.msra.mxu0 0.0
          %542 = vmatprep.subr.mxu0 0.0
          %543 = vmatpush1.msra.mxu0 0.0
          %544 = vmatprep.subr.mxu0 0.0
          %545 = vmatpush1.msra.mxu0 0.0
          %546 = vmatprep.subr.mxu0 0.0
          %547 = vmatpush1.msra.mxu0 0.0
          %548 = vmatprep.subr.mxu0 0.0
          %549 = vmatpush1.msra.mxu0 0.0
          %550 = vmatprep.subr.mxu0 0.0
          %551 = vmatpush1.msra.mxu0 0.0
          %552 = vmatprep.subr.mxu0 0.0
          %553 = vmatpush1.msra.mxu0 0.0
          %554 = vmatprep.subr.mxu0 0.0
          %555 = vmatpush1.msra.mxu0 0.0
          %556 = vmatprep.subr.mxu0 0.0
          %557 = vmatpush1.msra.mxu0 0.0
          %558 = vmatprep.subr.mxu0 0.0
          %559 = vmatpush1.msra.mxu0 0.0
          %560 = vmatprep.mubr.f32.mxu0 0.0
          %561 = vmatmul.mubr.f32.gmra.mrb[0].mxu0 %v420
          %v562 = vpop.f32.mrb[0].mxu0
          %v563 = vadd.f32 %v489, %v562
          %v564 = vpop.f32.mrb[0].mxu0
          %v565 = vadd.f32 %v493, %v564
          %566 = vmatprep.mubr.f32.mxu0 0.0
          %567 = vmatmul.mubr.f32.gmra.mrb[0].mxu0 %v421
          %v568 = vpop.f32.mrb[0].mxu0
          %v569 = vadd.f32 %v489, %v568
          %v570 = vpop.f32.mrb[0].mxu0
          %v571 = vadd.f32 %v493, %v570
          %572 = vmatprep.mubr.f32.mxu0 0.0
          %573 = vmatmul.mubr.f32.gmra.mrb[0].mxu0 %v422
          %v574 = vpop.f32.mrb[0].mxu0
          %v575 = vadd.f32 %v489, %v574
          %v576 = vpop.f32.mrb[0].mxu0
          %v577 = vadd.f32 %v493, %v576
          %578 = vmatprep.mubr.f32.mxu0 0.0
          %579 = vmatmul.mubr.f32.gmra.mrb[0].mxu0 %v423
          %v580 = vpop.f32.mrb[0].mxu0
          %v581 = vadd.f32 %v489, %v580
          %v582 = vpop.f32.mrb[0].mxu0
          %v583 = vadd.f32 %v493, %v582
          %584 = vmatprep.mubr.f32.mxu0 0.0
          %585 = vmatmul.mubr.f32.gmra.mrb[0].mxu0 %v424
          %v586 = vpop.f32.mrb[0].mxu0
          %v587 = vadd.f32 %v489, %v586
          %v588 = vpop.f32.mrb[0].mxu0
          %v589 = vadd.f32 %v493, %v588
          %590 = vmatprep.mubr.f32.mxu0 0.0
          %591 = vmatmul.mubr.f32.gmra.mrb[0].mxu0 %v425
          %v592 = vpop.f32.mrb[0].mxu0
          %v593 = vadd.f32 %v489, %v592
          %v594 = vpop.f32.mrb[0].mxu0
          %v595 = vadd.f32 %v493, %v594
          %596 = vmatprep.mubr.f32.mxu0 0.0
          %597 = vmatmul.mubr.f32.gmra.mrb[0].mxu0 %v426
          %v598 = vpop.f32.mrb[0].mxu0
          %v599 = vadd.f32 %v489, %v598
          %v600 = vpop.f32.mrb[0].mxu0
          %v601 = vadd.f32 %v493, %v600
          %602 = vmatprep.mubr.f32.mxu0 0.0
          %603 = vmatmul.mubr.f32.gmra.mrb[0].mxu0 %v427
          %v604 = vpop.f32.mrb[0].mxu0
          %v605 = vadd.f32 %v489, %v604
          %v606 = vpop.f32.mrb[0].mxu0
          %v607 = vadd.f32 %v493, %v606
          %608 = vmatprep.mubr.f32.mxu0 0.0
          %609 = vmatmul.mubr.f32.gmra.mrb[0].mxu0 %v428
          %v610 = vpop.f32.mrb[0].mxu0
          %v611 = vadd.f32 %v489, %v610
          %v612 = vpop.f32.mrb[0].mxu0
          %v613 = vadd.f32 %v493, %v612
          %614 = vmatprep.mubr.f32.mxu0 0.0
          %615 = vmatmul.mubr.f32.gmra.mrb[0].mxu0 %v429
          %v616 = vpop.f32.mrb[0].mxu0
          %v617 = vadd.f32 %v489, %v616
          %v618 = vpop.f32.mrb[0].mxu0
          %v619 = vadd.f32 %v493, %v618
          %620 = vmatprep.mubr.f32.mxu0 0.0
          %621 = vmatmul.mubr.f32.gmra.mrb[0].mxu0 %v430
          %v622 = vpop.f32.mrb[0].mxu0
          %v623 = vadd.f32 %v489, %v622
          %v624 = vpop.f32.mrb[0].mxu0
          %v625 = vadd.f32 %v493, %v624
          %626 = vmatprep.mubr.f32.mxu0 0.0
          %627 = vmatmul.mubr.f32.gmra.mrb[0].mxu0 %v431
          %v628 = vpop.f32.mrb[0].mxu0
          %v629 = vadd.f32 %v489, %v628
          %v630 = vpop.f32.mrb[0].mxu0
          %v631 = vadd.f32 %v493, %v630
          %632 = vmatprep.mubr.f32.mxu0 0.0
          %633 = vmatmul.mubr.f32.gmra.mrb[0].mxu0 %v432
          %v634 = vpop.f32.mrb[0].mxu0
          %v635 = vadd.f32 %v489, %v634
          %v636 = vpop.f32.mrb[0].mxu0
          %v637 = vadd.f32 %v493, %v636
          %638 = vmatprep.mubr.f32.mxu0 0.0
          %639 = vmatmul.mubr.f32.gmra.mrb[0].mxu0 %v433
          %v640 = vpop.f32.mrb[0].mxu0
          %v641 = vadd.f32 %v489, %v640
          %v642 = vpop.f32.mrb[0].mxu0
          %v643 = vadd.f32 %v493, %v642
          %644 = vmatprep.mubr.f32.mxu0 0.0
          %645 = vmatmul.mubr.f32.gmra.mrb[0].mxu0 %v434
          %v646 = vpop.f32.mrb[0].mxu0
          %v647 = vadd.f32 %v489, %v646
          %v648 = vpop.f32.mrb[0].mxu0
          %v649 = vadd.f32 %v493, %v648
          %650 = vmatprep.mubr.f32.mxu0 0.0
          %651 = vmatmul.mubr.f32.gmra.mrb[0].mxu0 %v435
          %v652 = vpop.f32.mrb[0].mxu0
          %v653 = vadd.f32 %v489, %v652
          %v654 = vpop.f32.mrb[0].mxu0
          %v655 = vadd.f32 %v493, %v654
          %656 = vmatprep.mubr.f32.mxu0 0.0
          %657 = vmatmul.mubr.f32.gmra.mrb[0].mxu0 %v436
          %v658 = vpop.f32.mrb[0].mxu0
          %v659 = vadd.f32 %v489, %v658
          %v660 = vpop.f32.mrb[0].mxu0
          %v661 = vadd.f32 %v493, %v660
          %662 = vmatprep.mubr.f32.mxu0 0.0
          %663 = vmatmul.mubr.f32.gmra.mrb[0].mxu0 %v437
          %v664 = vpop.f32.mrb[0].mxu0
          %v665 = vadd.f32 %v489, %v664
          %v666 = vpop.f32.mrb[0].mxu0
          %v667 = vadd.f32 %v493, %v666
          %668 = vmatprep.mubr.f32.mxu0 0.0
          %669 = vmatmul.mubr.f32.gmra.mrb[0].mxu0 %v438
          %v670 = vpop.f32.mrb[0].mxu0
          %v671 = vadd.f32 %v489, %v670
          %v672 = vpop.f32.mrb[0].mxu0
          %v673 = vadd.f32 %v493, %v672
          %674 = vmatprep.mubr.f32.mxu0 0.0
          %675 = vmatmul.mubr.f32.gmra.mrb[0].mxu0 %v439
          %v676 = vpop.f32.mrb[0].mxu0
          %v677 = vadd.f32 %v489, %v676
          %v678 = vpop.f32.mrb[0].mxu0
          %v679 = vadd.f32 %v493, %v678
          %680 = vmatprep.mubr.f32.mxu0 0.0
          %681 = vmatmul.mubr.f32.gmra.mrb[0].mxu0 %v440
          %v682 = vpop.f32.mrb[0].mxu0
          %v683 = vadd.f32 %v489, %v682
          %v684 = vpop.f32.mrb[0].mxu0
          %v685 = vadd.f32 %v493, %v684
          %686 = vmatprep.mubr.f32.mxu0 0.0
          %687 = vmatmul.mubr.f32.gmra.mrb[0].mxu0 %v441
          %v688 = vpop.f32.mrb[0].mxu0
          %v689 = vadd.f32 %v489, %v688
          %v690 = vpop.f32.mrb[0].mxu0
          %v691 = vadd.f32 %v493, %v690
          %692 = vmatprep.mubr.f32.mxu0 0.0
          %693 = vmatmul.mubr.f32.gmra.mrb[0].mxu0 %v442
          %v694 = vpop.f32.mrb[0].mxu0
          %v695 = vadd.f32 %v489, %v694
          %v696 = vpop.f32.mrb[0].mxu0
          %v697 = vadd.f32 %v493, %v696
          %698 = vmatprep.mubr.f32.mxu0 0.0
          %699 = vmatmul.mubr.f32.gmra.mrb[0].mxu0 %v443
          %v700 = vpop.f32.mrb[0].mxu0
          %v701 = vadd.f32 %v489, %v700
          %v702 = vpop.f32.mrb[0].mxu0
          %v703 = vadd.f32 %v493, %v702
          %704 = vmatprep.mubr.f32.mxu0 0.0
          %705 = vmatmul.mubr.f32.gmra.mrb[0].mxu0 %v444
          %v706 = vpop.f32.mrb[0].mxu0
          %v707 = vadd.f32 %v489, %v706
          %v708 = vpop.f32.mrb[0].mxu0
          %v709 = vadd.f32 %v493, %v708
          %710 = vmatprep.mubr.f32.mxu0 0.0
          %711 = vmatmul.mubr.f32.gmra.mrb[0].mxu0 %v445
          %v712 = vpop.f32.mrb[0].mxu0
          %v713 = vadd.f32 %v489, %v712
          %v714 = vpop.f32.mrb[0].mxu0
          %v715 = vadd.f32 %v493, %v714
          %716 = vmatprep.mubr.f32.mxu0 0.0
          %717 = vmatmul.mubr.f32.gmra.mrb[0].mxu0 %v446
          %v718 = vpop.f32.mrb[0].mxu0
          %v719 = vadd.f32 %v489, %v718
          %v720 = vpop.f32.mrb[0].mxu0
          %v721 = vadd.f32 %v493, %v720
          %722 = vmatprep.mubr.f32.mxu0 0.0
          %723 = vmatmul.mubr.f32.gmra.mrb[0].mxu0 %v447
          %v724 = vpop.f32.mrb[0].mxu0
          %v725 = vadd.f32 %v489, %v724
          %v726 = vpop.f32.mrb[0].mxu0
          %v727 = vadd.f32 %v493, %v726
          %728 = vmatprep.mubr.f32.mxu0 0.0
          %729 = vmatmul.mubr.f32.gmra.mrb[0].mxu0 %v448
          %v730 = vpop.f32.mrb[0].mxu0
          %v731 = vadd.f32 %v489, %v730
          %v732 = vpop.f32.mrb[0].mxu0
          %v733 = vadd.f32 %v493, %v732
          %734 = vmatprep.mubr.f32.mxu0 0.0
          %735 = vmatmul.mubr.f32.gmra.mrb[0].mxu0 %v449
          %v736 = vpop.f32.mrb[0].mxu0
          %v737 = vadd.f32 %v489, %v736
          %v738 = vpop.f32.mrb[0].mxu0
          %v739 = vadd.f32 %v493, %v738
          %740 = vmatprep.mubr.f32.mxu0 0.0
          %741 = vmatmul.mubr.f32.gmra.mrb[0].mxu0 %v450
          %v742 = vpop.f32.mrb[0].mxu0
          %v743 = vadd.f32 %v489, %v742
          %v744 = vpop.f32.mrb[0].mxu0
          %v745 = vadd.f32 %v493, %v744
          %746 = vmatprep.mubr.f32.mxu0 0.0
          %747 = vmatmul.mubr.f32.gmra.mrb[0].mxu0 %v451
          %v748 = vpop.f32.mrb[0].mxu0
          %v749 = vadd.f32 %v489, %v748
          %v750 = vpop.f32.mrb[0].mxu0
          %v751 = vadd.f32 %v493, %v750
          %752 = vdwg.mxu0
          %753 = vst [vmem:[#allocation2] sm:$0xff] %v563
          %754 = vst [vmem:[#allocation2 + $0x8] sm:$0xff] %v565
          %755 = vst [vmem:[#allocation2 + $0x10] sm:$0xff] %v569
          %756 = vst [vmem:[#allocation2 + $0x18] sm:$0xff] %v571
          %757 = vst [vmem:[#allocation2 + $0x20] sm:$0xff] %v575
          %758 = vst [vmem:[#allocation2 + $0x28] sm:$0xff] %v577
          %759 = vst [vmem:[#allocation2 + $0x30] sm:$0xff] %v581
          %760 = vst [vmem:[#allocation2 + $0x38] sm:$0xff] %v583
          %761 = vst [vmem:[#allocation2 + $0x40] sm:$0xff] %v587
          %762 = vst [vmem:[#allocation2 + $0x48] sm:$0xff] %v589
          %763 = vst [vmem:[#allocation2 + $0x50] sm:$0xff] %v593
          %764 = vst [vmem:[#allocation2 + $0x58] sm:$0xff] %v595
          %765 = vst [vmem:[#allocation2 + $0x60] sm:$0xff] %v599
          %766 = vst [vmem:[#allocation2 + $0x68] sm:$0xff] %v601
          %767 = vst [vmem:[#allocation2 + $0x70] sm:$0xff] %v605
          %768 = vst [vmem:[#allocation2 + $0x78] sm:$0xff] %v607
          %769 = vst [vmem:[#allocation2 + $0x80] sm:$0xff] %v611
          %770 = vst [vmem:[#allocation2 + $0x88] sm:$0xff] %v613
          %771 = vst [vmem:[#allocation2 + $0x90] sm:$0xff] %v617
          %772 = vst [vmem:[#allocation2 + $0x98] sm:$0xff] %v619
          %773 = vst [vmem:[#allocation2 + $0xa0] sm:$0xff] %v623
          %774 = vst [vmem:[#allocation2 + $0xa8] sm:$0xff] %v625
          %775 = vst [vmem:[#allocation2 + $0xb0] sm:$0xff] %v629
          %776 = vst [vmem:[#allocation2 + $0xb8] sm:$0xff] %v631
          %777 = vst [vmem:[#allocation2 + $0xc0] sm:$0xff] %v635
          %778 = vst [vmem:[#allocation2 + $0xc8] sm:$0xff] %v637
          %779 = vst [vmem:[#allocation2 + $0xd0] sm:$0xff] %v641
          %780 = vst [vmem:[#allocation2 + $0xd8] sm:$0xff] %v643
          %781 = vst [vmem:[#allocation2 + $0xe0] sm:$0xff] %v647
          %782 = vst [vmem:[#allocation2 + $0xe8] sm:$0xff] %v649
          %783 = vst [vmem:[#allocation2 + $0xf0] sm:$0xff] %v653
          %784 = vst [vmem:[#allocation2 + $0xf8] sm:$0xff] %v655
          %785 = vst [vmem:[#allocation2 + $0x100] sm:$0xff] %v659
          %786 = vst [vmem:[#allocation2 + $0x108] sm:$0xff] %v661
          %787 = vst [vmem:[#allocation2 + $0x110] sm:$0xff] %v665
          %788 = vst [vmem:[#allocation2 + $0x118] sm:$0xff] %v667
          %789 = vst [vmem:[#allocation2 + $0x120] sm:$0xff] %v671
          %790 = vst [vmem:[#allocation2 + $0x128] sm:$0xff] %v673
          %791 = vst [vmem:[#allocation2 + $0x130] sm:$0xff] %v677
          %792 = vst [vmem:[#allocation2 + $0x138] sm:$0xff] %v679
          %793 = vst [vmem:[#allocation2 + $0x140] sm:$0xff] %v683
          %794 = vst [vmem:[#allocation2 + $0x148] sm:$0xff] %v685
          %795 = vst [vmem:[#allocation2 + $0x150] sm:$0xff] %v689
          %796 = vst [vmem:[#allocation2 + $0x158] sm:$0xff] %v691
          %797 = vst [vmem:[#allocation2 + $0x160] sm:$0xff] %v695
          %798 = vst [vmem:[#allocation2 + $0x168] sm:$0xff] %v697
          %799 = vst [vmem:[#allocation2 + $0x170] sm:$0xff] %v701
          %800 = vst [vmem:[#allocation2 + $0x178] sm:$0xff] %v703
          %801 = vst [vmem:[#allocation2 + $0x180] sm:$0xff] %v707
          %802 = vst [vmem:[#allocation2 + $0x188] sm:$0xff] %v709
          %803 = vst [vmem:[#allocation2 + $0x190] sm:$0xff] %v713
          %804 = vst [vmem:[#allocation2 + $0x198] sm:$0xff] %v715
          %805 = vst [vmem:[#allocation2 + $0x1a0] sm:$0xff] %v719
          %806 = vst [vmem:[#allocation2 + $0x1a8] sm:$0xff] %v721
          %807 = vst [vmem:[#allocation2 + $0x1b0] sm:$0xff] %v725
          %808 = vst [vmem:[#allocation2 + $0x1b8] sm:$0xff] %v727
          %809 = vst [vmem:[#allocation2 + $0x1c0] sm:$0xff] %v731
          %810 = vst [vmem:[#allocation2 + $0x1c8] sm:$0xff] %v733
          %811 = vst [vmem:[#allocation2 + $0x1d0] sm:$0xff] %v737
          %812 = vst [vmem:[#allocation2 + $0x1d8] sm:$0xff] %v739
          %813 = vst [vmem:[#allocation2 + $0x1e0] sm:$0xff] %v743
          %814 = vst [vmem:[#allocation2 + $0x1e8] sm:$0xff] %v745
          %815 = vst [vmem:[#allocation2 + $0x1f0] sm:$0xff] %v749
          %816 = vst [vmem:[#allocation2 + $0x1f8] sm:$0xff] %v751
        $region60: #{tpu_custom_call.1} parent=39 // pred_fallthru
          _
        %v817 = vld [vmem:[#allocation2] sm:$0xff]
        %v818 = vld [vmem:[#allocation2 + $0x8] sm:$0xff]
        %v819 = vld [vmem:[#allocation2 + $0x10] sm:$0xff]
        %v820 = vld [vmem:[#allocation2 + $0x18] sm:$0xff]
        %v821 = vld [vmem:[#allocation2 + $0x20] sm:$0xff]
        %v822 = vld [vmem:[#allocation2 + $0x28] sm:$0xff]
        %v823 = vld [vmem:[#allocation2 + $0x30] sm:$0xff]
        %v824 = vld [vmem:[#allocation2 + $0x38] sm:$0xff]
        %v825 = vld [vmem:[#allocation2 + $0x40] sm:$0xff]
        %v826 = vld [vmem:[#allocation2 + $0x48] sm:$0xff]
        %v827 = vld [vmem:[#allocation2 + $0x50] sm:$0xff]
        %v828 = vld [vmem:[#allocation2 + $0x58] sm:$0xff]
        %v829 = vld [vmem:[#allocation2 + $0x60] sm:$0xff]
        %v830 = vld [vmem:[#allocation2 + $0x68] sm:$0xff]
        %v831 = vld [vmem:[#allocation2 + $0x70] sm:$0xff]
        %v832 = vld [vmem:[#allocation2 + $0x78] sm:$0xff]
        %v833 = vld [vmem:[#allocation2 + $0x80] sm:$0xff]
        %v834 = vld [vmem:[#allocation2 + $0x88] sm:$0xff]
        %v835 = vld [vmem:[#allocation2 + $0x90] sm:$0xff]
        %v836 = vld [vmem:[#allocation2 + $0x98] sm:$0xff]
        %v837 = vld [vmem:[#allocation2 + $0xa0] sm:$0xff]
        %v838 = vld [vmem:[#allocation2 + $0xa8] sm:$0xff]
        %v839 = vld [vmem:[#allocation2 + $0xb0] sm:$0xff]
        %v840 = vld [vmem:[#allocation2 + $0xb8] sm:$0xff]
        %v841 = vld [vmem:[#allocation2 + $0xc0] sm:$0xff]
        %v842 = vld [vmem:[#allocation2 + $0xc8] sm:$0xff]
        %v843 = vld [vmem:[#allocation2 + $0xd0] sm:$0xff]
        %v844 = vld [vmem:[#allocation2 + $0xd8] sm:$0xff]
        %v845 = vld [vmem:[#allocation2 + $0xe0] sm:$0xff]
        %v846 = vld [vmem:[#allocation2 + $0xe8] sm:$0xff]
        %v847 = vld [vmem:[#allocation2 + $0xf0] sm:$0xff]
        %v848 = vld [vmem:[#allocation2 + $0xf8] sm:$0xff]
        %v849 = vld [vmem:[#allocation2 + $0x100] sm:$0xff]
        %v850 = vld [vmem:[#allocation2 + $0x108] sm:$0xff]
        %v851 = vld [vmem:[#allocation2 + $0x110] sm:$0xff]
        %v852 = vld [vmem:[#allocation2 + $0x118] sm:$0xff]
        %v853 = vld [vmem:[#allocation2 + $0x120] sm:$0xff]
        %v854 = vld [vmem:[#allocation2 + $0x128] sm:$0xff]
        %v855 = vld [vmem:[#allocation2 + $0x130] sm:$0xff]
        %v856 = vld [vmem:[#allocation2 + $0x138] sm:$0xff]
        %v857 = vld [vmem:[#allocation2 + $0x140] sm:$0xff]
        %v858 = vld [vmem:[#allocation2 + $0x148] sm:$0xff]
        %v859 = vld [vmem:[#allocation2 + $0x150] sm:$0xff]
        %v860 = vld [vmem:[#allocation2 + $0x158] sm:$0xff]
        %v861 = vld [vmem:[#allocation2 + $0x160] sm:$0xff]
        %v862 = vld [vmem:[#allocation2 + $0x168] sm:$0xff]
        %v863 = vld [vmem:[#allocation2 + $0x170] sm:$0xff]
        %v864 = vld [vmem:[#allocation2 + $0x178] sm:$0xff]
        %v865 = vld [vmem:[#allocation2 + $0x180] sm:$0xff]
        %v866 = vld [vmem:[#allocation2 + $0x188] sm:$0xff]
        %v867 = vld [vmem:[#allocation2 + $0x190] sm:$0xff]
        %v868 = vld [vmem:[#allocation2 + $0x198] sm:$0xff]
        %v869 = vld [vmem:[#allocation2 + $0x1a0] sm:$0xff]
        %v870 = vld [vmem:[#allocation2 + $0x1a8] sm:$0xff]
        %v871 = vld [vmem:[#allocation2 + $0x1b0] sm:$0xff]
        %v872 = vld [vmem:[#allocation2 + $0x1b8] sm:$0xff]
        %v873 = vld [vmem:[#allocation2 + $0x1c0] sm:$0xff]
        %v874 = vld [vmem:[#allocation2 + $0x1c8] sm:$0xff]
        %v875 = vld [vmem:[#allocation2 + $0x1d0] sm:$0xff]
        %v876 = vld [vmem:[#allocation2 + $0x1d8] sm:$0xff]
        %v877 = vld [vmem:[#allocation2 + $0x1e0] sm:$0xff]
        %v878 = vld [vmem:[#allocation2 + $0x1e8] sm:$0xff]
        %v879 = vld [vmem:[#allocation2 + $0x1f0] sm:$0xff]
        %v880 = vld [vmem:[#allocation2 + $0x1f8] sm:$0xff]
        %v881 = vld [vmem:[%s331] sm:$0xff]
        %v882 = vld [vmem:[%s331 + $0x8] sm:$0xff]
        %v883 = vld [vmem:[%s331 + $0x10] sm:$0xff]
        %v884 = vld [vmem:[%s331 + $0x18] sm:$0xff]
        %v885 = vld [vmem:[%s331 + $0x20] sm:$0xff]
        %v886 = vld [vmem:[%s331 + $0x28] sm:$0xff]
        %v887 = vld [vmem:[%s331 + $0x30] sm:$0xff]
        %v888 = vld [vmem:[%s331 + $0x38] sm:$0xff]
        %v889 = vld [vmem:[%s331 + $0x40] sm:$0xff]
        %v890 = vld [vmem:[%s331 + $0x48] sm:$0xff]
        %v891 = vld [vmem:[%s331 + $0x50] sm:$0xff]
        %v892 = vld [vmem:[%s331 + $0x58] sm:$0xff]
        %v893 = vld [vmem:[%s331 + $0x60] sm:$0xff]
        %v894 = vld [vmem:[%s331 + $0x68] sm:$0xff]
        %v895 = vld [vmem:[%s331 + $0x70] sm:$0xff]
        %v896 = vld [vmem:[%s331 + $0x78] sm:$0xff]
        %v897 = vld [vmem:[%s331 + $0x80] sm:$0xff]
        %v898 = vld [vmem:[%s331 + $0x88] sm:$0xff]
        %v899 = vld [vmem:[%s331 + $0x90] sm:$0xff]
        %v900 = vld [vmem:[%s331 + $0x98] sm:$0xff]
        %v901 = vld [vmem:[%s331 + $0xa0] sm:$0xff]
        %v902 = vld [vmem:[%s331 + $0xa8] sm:$0xff]
        %v903 = vld [vmem:[%s331 + $0xb0] sm:$0xff]
        %v904 = vld [vmem:[%s331 + $0xb8] sm:$0xff]
        %v905 = vld [vmem:[%s331 + $0xc0] sm:$0xff]
        %v906 = vld [vmem:[%s331 + $0xc8] sm:$0xff]
        %v907 = vld [vmem:[%s331 + $0xd0] sm:$0xff]
        %v908 = vld [vmem:[%s331 + $0xd8] sm:$0xff]
        %v909 = vld [vmem:[%s331 + $0xe0] sm:$0xff]
        %v910 = vld [vmem:[%s331 + $0xe8] sm:$0xff]
        %v911 = vld [vmem:[%s331 + $0xf0] sm:$0xff]
        %v912 = vld [vmem:[%s331 + $0xf8] sm:$0xff]
        %v913 = vld [vmem:[%s340] sm:$0xff]
        %v914 = vld [vmem:[%s340 + $0x8] sm:$0xff]
        %v915 = vld [vmem:[%s340 + $0x10] sm:$0xff]
        %v916 = vld [vmem:[%s340 + $0x18] sm:$0xff]
        %v917 = vld [vmem:[%s340 + $0x20] sm:$0xff]
        %v918 = vld [vmem:[%s340 + $0x28] sm:$0xff]
        %v919 = vld [vmem:[%s340 + $0x30] sm:$0xff]
        %v920 = vld [vmem:[%s340 + $0x38] sm:$0xff]
        %v921 = vld [vmem:[%s340 + $0x40] sm:$0xff]
        %v922 = vld [vmem:[%s340 + $0x48] sm:$0xff]
        %v923 = vld [vmem:[%s340 + $0x50] sm:$0xff]
        %v924 = vld [vmem:[%s340 + $0x58] sm:$0xff]
        %v925 = vld [vmem:[%s340 + $0x60] sm:$0xff]
        %v926 = vld [vmem:[%s340 + $0x68] sm:$0xff]
        %v927 = vld [vmem:[%s340 + $0x70] sm:$0xff]
        %v928 = vld [vmem:[%s340 + $0x78] sm:$0xff]
        %v929 = vld [vmem:[%s340 + $0x80] sm:$0xff]
        %v930 = vld [vmem:[%s340 + $0x88] sm:$0xff]
        %v931 = vld [vmem:[%s340 + $0x90] sm:$0xff]
        %v932 = vld [vmem:[%s340 + $0x98] sm:$0xff]
        %v933 = vld [vmem:[%s340 + $0xa0] sm:$0xff]
        %v934 = vld [vmem:[%s340 + $0xa8] sm:$0xff]
        %v935 = vld [vmem:[%s340 + $0xb0] sm:$0xff]
        %v936 = vld [vmem:[%s340 + $0xb8] sm:$0xff]
        %v937 = vld [vmem:[%s340 + $0xc0] sm:$0xff]
        %v938 = vld [vmem:[%s340 + $0xc8] sm:$0xff]
        %v939 = vld [vmem:[%s340 + $0xd0] sm:$0xff]
        %v940 = vld [vmem:[%s340 + $0xd8] sm:$0xff]
        %v941 = vld [vmem:[%s340 + $0xe0] sm:$0xff]
        %v942 = vld [vmem:[%s340 + $0xe8] sm:$0xff]
        %v943 = vld [vmem:[%s340 + $0xf0] sm:$0xff]
        %v944 = vld [vmem:[%s340 + $0xf8] sm:$0xff]
        %945 = vmatprep.subr.mxu0 %v914
        %946 = vmatpush1.msra.mxu0 %v913
        %947 = vmatprep.subr.mxu0 %v916
        %948 = vmatpush1.msra.mxu0 %v915
        %949 = vmatprep.subr.mxu0 %v918
        %950 = vmatpush1.msra.mxu0 %v917
        %951 = vmatprep.subr.mxu0 %v920
        %952 = vmatpush1.msra.mxu0 %v919
        %953 = vmatprep.subr.mxu0 %v922
        %954 = vmatpush1.msra.mxu0 %v921
        %955 = vmatprep.subr.mxu0 %v924
        %956 = vmatpush1.msra.mxu0 %v923
        %957 = vmatprep.subr.mxu0 %v926
        %958 = vmatpush1.msra.mxu0 %v925
        %959 = vmatprep.subr.mxu0 %v928
        %960 = vmatpush1.msra.mxu0 %v927
        %961 = vmatprep.subr.mxu0 %v930
        %962 = vmatpush1.msra.mxu0 %v929
        %963 = vmatprep.subr.mxu0 %v932
        %964 = vmatpush1.msra.mxu0 %v931
        %965 = vmatprep.subr.mxu0 %v934
        %966 = vmatpush1.msra.mxu0 %v933
        %967 = vmatprep.subr.mxu0 %v936
        %968 = vmatpush1.msra.mxu0 %v935
        %969 = vmatprep.subr.mxu0 %v938
        %970 = vmatpush1.msra.mxu0 %v937
        %971 = vmatprep.subr.mxu0 %v940
        %972 = vmatpush1.msra.mxu0 %v939
        %973 = vmatprep.subr.mxu0 %v942
        %974 = vmatpush1.msra.mxu0 %v941
        %975 = vmatprep.subr.mxu0 %v944
        %976 = vmatpush1.msra.mxu0 %v943
        %977 = vmatprep.subr.mxu0 0.0
        %978 = vmatpush1.msra.mxu0 0.0
        %979 = vmatprep.subr.mxu0 0.0
        %980 = vmatpush1.msra.mxu0 0.0
        %981 = vmatprep.subr.mxu0 0.0
        %982 = vmatpush1.msra.mxu0 0.0
        %983 = vmatprep.subr.mxu0 0.0
        %984 = vmatpush1.msra.mxu0 0.0
        %985 = vmatprep.subr.mxu0 0.0
        %986 = vmatpush1.msra.mxu0 0.0
        %987 = vmatprep.subr.mxu0 0.0
        %988 = vmatpush1.msra.mxu0 0.0
        %989 = vmatprep.subr.mxu0 0.0
        %990 = vmatpush1.msra.mxu0 0.0
        %991 = vmatprep.subr.mxu0 0.0
        %992 = vmatpush1.msra.mxu0 0.0
        %993 = vmatprep.subr.mxu0 0.0
        %994 = vmatpush1.msra.mxu0 0.0
        %995 = vmatprep.subr.mxu0 0.0
        %996 = vmatpush1.msra.mxu0 0.0
        %997 = vmatprep.subr.mxu0 0.0
        %998 = vmatpush1.msra.mxu0 0.0
        %999 = vmatprep.subr.mxu0 0.0
        %1000 = vmatpush1.msra.mxu0 0.0
        %1001 = vmatprep.subr.mxu0 0.0
        %1002 = vmatpush1.msra.mxu0 0.0
        %1003 = vmatprep.subr.mxu0 0.0
        %1004 = vmatpush1.msra.mxu0 0.0
        %1005 = vmatprep.subr.mxu0 0.0
        %1006 = vmatpush1.msra.mxu0 0.0
        %1007 = vmatprep.subr.mxu0 0.0
        %1008 = vmatpush1.msra.mxu0 0.0
        %1009 = vmatprep.mubr.f32.mxu0 0.0
        %1010 = vmatmul.mubr.f32.gmra.mrb[0].mxu0 %v881
        %v1011 = vpop.f32.mrb[0].mxu0
        %v1012 = vadd.f32 0.0, %v1011
        %v1013 = vpop.f32.mrb[0].mxu0
        %v1014 = vadd.f32 0.0, %v1013
        %1015 = vmatprep.mubr.f32.mxu0 0.0
        %1016 = vmatmul.mubr.f32.gmra.mrb[0].mxu0 %v882
        %v1017 = vpop.f32.mrb[0].mxu0
        %v1018 = vadd.f32 0.0, %v1017
        %v1019 = vpop.f32.mrb[0].mxu0
        %v1020 = vadd.f32 0.0, %v1019
        %1021 = vmatprep.mubr.f32.mxu0 0.0
        %1022 = vmatmul.mubr.f32.gmra.mrb[0].mxu0 %v883
        %v1023 = vpop.f32.mrb[0].mxu0
        %v1024 = vadd.f32 0.0, %v1023
        %v1025 = vpop.f32.mrb[0].mxu0
        %v1026 = vadd.f32 0.0, %v1025
        %1027 = vmatprep.mubr.f32.mxu0 0.0
        %1028 = vmatmul.mubr.f32.gmra.mrb[0].mxu0 %v884
        %v1029 = vpop.f32.mrb[0].mxu0
        %v1030 = vadd.f32 0.0, %v1029
        %v1031 = vpop.f32.mrb[0].mxu0
        %v1032 = vadd.f32 0.0, %v1031
        %1033 = vmatprep.mubr.f32.mxu0 0.0
        %1034 = vmatmul.mubr.f32.gmra.mrb[0].mxu0 %v885
        %v1035 = vpop.f32.mrb[0].mxu0
        %v1036 = vadd.f32 0.0, %v1035
        %v1037 = vpop.f32.mrb[0].mxu0
        %v1038 = vadd.f32 0.0, %v1037
        %1039 = vmatprep.mubr.f32.mxu0 0.0
        %1040 = vmatmul.mubr.f32.gmra.mrb[0].mxu0 %v886
        %v1041 = vpop.f32.mrb[0].mxu0
        %v1042 = vadd.f32 0.0, %v1041
        %v1043 = vpop.f32.mrb[0].mxu0
        %v1044 = vadd.f32 0.0, %v1043
        %1045 = vmatprep.mubr.f32.mxu0 0.0
        %1046 = vmatmul.mubr.f32.gmra.mrb[0].mxu0 %v887
        %v1047 = vpop.f32.mrb[0].mxu0
        %v1048 = vadd.f32 0.0, %v1047
        %v1049 = vpop.f32.mrb[0].mxu0
        %v1050 = vadd.f32 0.0, %v1049
        %1051 = vmatprep.mubr.f32.mxu0 0.0
        %1052 = vmatmul.mubr.f32.gmra.mrb[0].mxu0 %v888
        %v1053 = vpop.f32.mrb[0].mxu0
        %v1054 = vadd.f32 0.0, %v1053
        %v1055 = vpop.f32.mrb[0].mxu0
        %v1056 = vadd.f32 0.0, %v1055
        %1057 = vmatprep.mubr.f32.mxu0 0.0
        %1058 = vmatmul.mubr.f32.gmra.mrb[0].mxu0 %v889
        %v1059 = vpop.f32.mrb[0].mxu0
        %v1060 = vadd.f32 0.0, %v1059
        %v1061 = vpop.f32.mrb[0].mxu0
        %v1062 = vadd.f32 0.0, %v1061
        %1063 = vmatprep.mubr.f32.mxu0 0.0
        %1064 = vmatmul.mubr.f32.gmra.mrb[0].mxu0 %v890
        %v1065 = vpop.f32.mrb[0].mxu0
        %v1066 = vadd.f32 0.0, %v1065
        %v1067 = vpop.f32.mrb[0].mxu0
        %v1068 = vadd.f32 0.0, %v1067
        %1069 = vmatprep.mubr.f32.mxu0 0.0
        %1070 = vmatmul.mubr.f32.gmra.mrb[0].mxu0 %v891
        %v1071 = vpop.f32.mrb[0].mxu0
        %v1072 = vadd.f32 0.0, %v1071
        %v1073 = vpop.f32.mrb[0].mxu0
        %v1074 = vadd.f32 0.0, %v1073
        %1075 = vmatprep.mubr.f32.mxu0 0.0
        %1076 = vmatmul.mubr.f32.gmra.mrb[0].mxu0 %v892
        %v1077 = vpop.f32.mrb[0].mxu0
        %v1078 = vadd.f32 0.0, %v1077
        %v1079 = vpop.f32.mrb[0].mxu0
        %v1080 = vadd.f32 0.0, %v1079
        %1081 = vmatprep.mubr.f32.mxu0 0.0
        %1082 = vmatmul.mubr.f32.gmra.mrb[0].mxu0 %v893
        %v1083 = vpop.f32.mrb[0].mxu0
        %v1084 = vadd.f32 0.0, %v1083
        %v1085 = vpop.f32.mrb[0].mxu0
        %v1086 = vadd.f32 0.0, %v1085
        %1087 = vmatprep.mubr.f32.mxu0 0.0
        %1088 = vmatmul.mubr.f32.gmra.mrb[0].mxu0 %v894
        %v1089 = vpop.f32.mrb[0].mxu0
        %v1090 = vadd.f32 0.0, %v1089
        %v1091 = vpop.f32.mrb[0].mxu0
        %v1092 = vadd.f32 0.0, %v1091
        %1093 = vmatprep.mubr.f32.mxu0 0.0
        %1094 = vmatmul.mubr.f32.gmra.mrb[0].mxu0 %v895
        %v1095 = vpop.f32.mrb[0].mxu0
        %v1096 = vadd.f32 0.0, %v1095
        %v1097 = vpop.f32.mrb[0].mxu0
        %v1098 = vadd.f32 0.0, %v1097
        %1099 = vmatprep.mubr.f32.mxu0 0.0
        %1100 = vmatmul.mubr.f32.gmra.mrb[0].mxu0 %v896
        %v1101 = vpop.f32.mrb[0].mxu0
        %v1102 = vadd.f32 0.0, %v1101
        %v1103 = vpop.f32.mrb[0].mxu0
        %v1104 = vadd.f32 0.0, %v1103
        %1105 = vmatprep.mubr.f32.mxu0 0.0
        %1106 = vmatmul.mubr.f32.gmra.mrb[0].mxu0 %v897
        %v1107 = vpop.f32.mrb[0].mxu0
        %v1108 = vadd.f32 0.0, %v1107
        %v1109 = vpop.f32.mrb[0].mxu0
        %v1110 = vadd.f32 0.0, %v1109
        %1111 = vmatprep.mubr.f32.mxu0 0.0
        %1112 = vmatmul.mubr.f32.gmra.mrb[0].mxu0 %v898
        %v1113 = vpop.f32.mrb[0].mxu0
        %v1114 = vadd.f32 0.0, %v1113
        %v1115 = vpop.f32.mrb[0].mxu0
        %v1116 = vadd.f32 0.0, %v1115
        %1117 = vmatprep.mubr.f32.mxu0 0.0
        %1118 = vmatmul.mubr.f32.gmra.mrb[0].mxu0 %v899
        %v1119 = vpop.f32.mrb[0].mxu0
        %v1120 = vadd.f32 0.0, %v1119
        %v1121 = vpop.f32.mrb[0].mxu0
        %v1122 = vadd.f32 0.0, %v1121
        %1123 = vmatprep.mubr.f32.mxu0 0.0
        %1124 = vmatmul.mubr.f32.gmra.mrb[0].mxu0 %v900
        %v1125 = vpop.f32.mrb[0].mxu0
        %v1126 = vadd.f32 0.0, %v1125
        %v1127 = vpop.f32.mrb[0].mxu0
        %v1128 = vadd.f32 0.0, %v1127
        %1129 = vmatprep.mubr.f32.mxu0 0.0
        %1130 = vmatmul.mubr.f32.gmra.mrb[0].mxu0 %v901
        %v1131 = vpop.f32.mrb[0].mxu0
        %v1132 = vadd.f32 0.0, %v1131
        %v1133 = vpop.f32.mrb[0].mxu0
        %v1134 = vadd.f32 0.0, %v1133
        %1135 = vmatprep.mubr.f32.mxu0 0.0
        %1136 = vmatmul.mubr.f32.gmra.mrb[0].mxu0 %v902
        %v1137 = vpop.f32.mrb[0].mxu0
        %v1138 = vadd.f32 0.0, %v1137
        %v1139 = vpop.f32.mrb[0].mxu0
        %v1140 = vadd.f32 0.0, %v1139
        %1141 = vmatprep.mubr.f32.mxu0 0.0
        %1142 = vmatmul.mubr.f32.gmra.mrb[0].mxu0 %v903
        %v1143 = vpop.f32.mrb[0].mxu0
        %v1144 = vadd.f32 0.0, %v1143
        %v1145 = vpop.f32.mrb[0].mxu0
        %v1146 = vadd.f32 0.0, %v1145
        %1147 = vmatprep.mubr.f32.mxu0 0.0
        %1148 = vmatmul.mubr.f32.gmra.mrb[0].mxu0 %v904
        %v1149 = vpop.f32.mrb[0].mxu0
        %v1150 = vadd.f32 0.0, %v1149
        %v1151 = vpop.f32.mrb[0].mxu0
        %v1152 = vadd.f32 0.0, %v1151
        %1153 = vmatprep.mubr.f32.mxu0 0.0
        %1154 = vmatmul.mubr.f32.gmra.mrb[0].mxu0 %v905
        %v1155 = vpop.f32.mrb[0].mxu0
        %v1156 = vadd.f32 0.0, %v1155
        %v1157 = vpop.f32.mrb[0].mxu0
        %v1158 = vadd.f32 0.0, %v1157
        %1159 = vmatprep.mubr.f32.mxu0 0.0
        %1160 = vmatmul.mubr.f32.gmra.mrb[0].mxu0 %v906
        %v1161 = vpop.f32.mrb[0].mxu0
        %v1162 = vadd.f32 0.0, %v1161
        %v1163 = vpop.f32.mrb[0].mxu0
        %v1164 = vadd.f32 0.0, %v1163
        %1165 = vmatprep.mubr.f32.mxu0 0.0
        %1166 = vmatmul.mubr.f32.gmra.mrb[0].mxu0 %v907
        %v1167 = vpop.f32.mrb[0].mxu0
        %v1168 = vadd.f32 0.0, %v1167
        %v1169 = vpop.f32.mrb[0].mxu0
        %v1170 = vadd.f32 0.0, %v1169
        %1171 = vmatprep.mubr.f32.mxu0 0.0
        %1172 = vmatmul.mubr.f32.gmra.mrb[0].mxu0 %v908
        %v1173 = vpop.f32.mrb[0].mxu0
        %v1174 = vadd.f32 0.0, %v1173
        %v1175 = vpop.f32.mrb[0].mxu0
        %v1176 = vadd.f32 0.0, %v1175
        %1177 = vmatprep.mubr.f32.mxu0 0.0
        %1178 = vmatmul.mubr.f32.gmra.mrb[0].mxu0 %v909
        %v1179 = vpop.f32.mrb[0].mxu0
        %v1180 = vadd.f32 0.0, %v1179
        %v1181 = vpop.f32.mrb[0].mxu0
        %v1182 = vadd.f32 0.0, %v1181
        %1183 = vmatprep.mubr.f32.mxu0 0.0
        %1184 = vmatmul.mubr.f32.gmra.mrb[0].mxu0 %v910
        %v1185 = vpop.f32.mrb[0].mxu0
        %v1186 = vadd.f32 0.0, %v1185
        %v1187 = vpop.f32.mrb[0].mxu0
        %v1188 = vadd.f32 0.0, %v1187
        %1189 = vmatprep.mubr.f32.mxu0 0.0
        %1190 = vmatmul.mubr.f32.gmra.mrb[0].mxu0 %v911
        %v1191 = vpop.f32.mrb[0].mxu0
        %v1192 = vadd.f32 0.0, %v1191
        %v1193 = vpop.f32.mrb[0].mxu0
        %v1194 = vadd.f32 0.0, %v1193
        %1195 = vmatprep.mubr.f32.mxu0 0.0
        %1196 = vmatmul.mubr.f32.gmra.mrb[0].mxu0 %v912
        %v1197 = vpop.f32.mrb[0].mxu0
        %v1198 = vadd.f32 0.0, %v1197
        %v1199 = vpop.f32.mrb[0].mxu0
        %v1200 = vadd.f32 0.0, %v1199
        %1201 = vdwg.mxu0
        %v1202 = vadd.f32 %v817, %v1012
        %v1203 = vadd.f32 %v818, %v1014
        %v1204 = vadd.f32 %v819, %v1018
        %v1205 = vadd.f32 %v820, %v1020
        %v1206 = vadd.f32 %v821, %v1024
        %v1207 = vadd.f32 %v822, %v1026
        %v1208 = vadd.f32 %v823, %v1030
        %v1209 = vadd.f32 %v824, %v1032
        %v1210 = vadd.f32 %v825, %v1036
        %v1211 = vadd.f32 %v826, %v1038
        %v1212 = vadd.f32 %v827, %v1042
        %v1213 = vadd.f32 %v828, %v1044
        %v1214 = vadd.f32 %v829, %v1048
        %v1215 = vadd.f32 %v830, %v1050
        %v1216 = vadd.f32 %v831, %v1054
        %v1217 = vadd.f32 %v832, %v1056
        %v1218 = vadd.f32 %v833, %v1060
        %v1219 = vadd.f32 %v834, %v1062
        %v1220 = vadd.f32 %v835, %v1066
        %v1221 = vadd.f32 %v836, %v1068
        %v1222 = vadd.f32 %v837, %v1072
        %v1223 = vadd.f32 %v838, %v1074
        %v1224 = vadd.f32 %v839, %v1078
        %v1225 = vadd.f32 %v840, %v1080
        %v1226 = vadd.f32 %v841, %v1084
        %v1227 = vadd.f32 %v842, %v1086
        %v1228 = vadd.f32 %v843, %v1090
        %v1229 = vadd.f32 %v844, %v1092
        %v1230 = vadd.f32 %v845, %v1096
        %v1231 = vadd.f32 %v846, %v1098
        %v1232 = vadd.f32 %v847, %v1102
        %v1233 = vadd.f32 %v848, %v1104
        %v1234 = vadd.f32 %v849, %v1108
        %v1235 = vadd.f32 %v850, %v1110
        %v1236 = vadd.f32 %v851, %v1114
        %v1237 = vadd.f32 %v852, %v1116
        %v1238 = vadd.f32 %v853, %v1120
        %v1239 = vadd.f32 %v854, %v1122
        %v1240 = vadd.f32 %v855, %v1126
        %v1241 = vadd.f32 %v856, %v1128
        %v1242 = vadd.f32 %v857, %v1132
        %v1243 = vadd.f32 %v858, %v1134
        %v1244 = vadd.f32 %v859, %v1138
        %v1245 = vadd.f32 %v860, %v1140
        %v1246 = vadd.f32 %v861, %v1144
        %v1247 = vadd.f32 %v862, %v1146
        %v1248 = vadd.f32 %v863, %v1150
        %v1249 = vadd.f32 %v864, %v1152
        %v1250 = vadd.f32 %v865, %v1156
        %v1251 = vadd.f32 %v866, %v1158
        %v1252 = vadd.f32 %v867, %v1162
        %v1253 = vadd.f32 %v868, %v1164
        %v1254 = vadd.f32 %v869, %v1168
        %v1255 = vadd.f32 %v870, %v1170
        %v1256 = vadd.f32 %v871, %v1174
        %v1257 = vadd.f32 %v872, %v1176
        %v1258 = vadd.f32 %v873, %v1180
        %v1259 = vadd.f32 %v874, %v1182
        %v1260 = vadd.f32 %v875, %v1186
        %v1261 = vadd.f32 %v876, %v1188
        %v1262 = vadd.f32 %v877, %v1192
        %v1263 = vadd.f32 %v878, %v1194
        %v1264 = vadd.f32 %v879, %v1198
        %v1265 = vadd.f32 %v880, %v1200
        %1266 = vst [vmem:[#allocation2] sm:$0xff] %v1202
        %1267 = vst [vmem:[#allocation2 + $0x8] sm:$0xff] %v1203
        %1268 = vst [vmem:[#allocation2 + $0x10] sm:$0xff] %v1204
        %1269 = vst [vmem:[#allocation2 + $0x18] sm:$0xff] %v1205
        %1270 = vst [vmem:[#allocation2 + $0x20] sm:$0xff] %v1206
        %1271 = vst [vmem:[#allocation2 + $0x28] sm:$0xff] %v1207
        %1272 = vst [vmem:[#allocation2 + $0x30] sm:$0xff] %v1208
        %1273 = vst [vmem:[#allocation2 + $0x38] sm:$0xff] %v1209
        %1274 = vst [vmem:[#allocation2 + $0x40] sm:$0xff] %v1210
        %1275 = vst [vmem:[#allocation2 + $0x48] sm:$0xff] %v1211
        %1276 = vst [vmem:[#allocation2 + $0x50] sm:$0xff] %v1212
        %1277 = vst [vmem:[#allocation2 + $0x58] sm:$0xff] %v1213
        %1278 = vst [vmem:[#allocation2 + $0x60] sm:$0xff] %v1214
        %1279 = vst [vmem:[#allocation2 + $0x68] sm:$0xff] %v1215
        %1280 = vst [vmem:[#allocation2 + $0x70] sm:$0xff] %v1216
        %1281 = vst [vmem:[#allocation2 + $0x78] sm:$0xff] %v1217
        %1282 = vst [vmem:[#allocation2 + $0x80] sm:$0xff] %v1218
        %1283 = vst [vmem:[#allocation2 + $0x88] sm:$0xff] %v1219
        %1284 = vst [vmem:[#allocation2 + $0x90] sm:$0xff] %v1220
        %1285 = vst [vmem:[#allocation2 + $0x98] sm:$0xff] %v1221
        %1286 = vst [vmem:[#allocation2 + $0xa0] sm:$0xff] %v1222
        %1287 = vst [vmem:[#allocation2 + $0xa8] sm:$0xff] %v1223
        %1288 = vst [vmem:[#allocation2 + $0xb0] sm:$0xff] %v1224
        %1289 = vst [vmem:[#allocation2 + $0xb8] sm:$0xff] %v1225
        %1290 = vst [vmem:[#allocation2 + $0xc0] sm:$0xff] %v1226
        %1291 = vst [vmem:[#allocation2 + $0xc8] sm:$0xff] %v1227
        %1292 = vst [vmem:[#allocation2 + $0xd0] sm:$0xff] %v1228
        %1293 = vst [vmem:[#allocation2 + $0xd8] sm:$0xff] %v1229
        %1294 = vst [vmem:[#allocation2 + $0xe0] sm:$0xff] %v1230
        %1295 = vst [vmem:[#allocation2 + $0xe8] sm:$0xff] %v1231
        %1296 = vst [vmem:[#allocation2 + $0xf0] sm:$0xff] %v1232
        %1297 = vst [vmem:[#allocation2 + $0xf8] sm:$0xff] %v1233
        %1298 = vst [vmem:[#allocation2 + $0x100] sm:$0xff] %v1234
        %1299 = vst [vmem:[#allocation2 + $0x108] sm:$0xff] %v1235
        %1300 = vst [vmem:[#allocation2 + $0x110] sm:$0xff] %v1236
        %1301 = vst [vmem:[#allocation2 + $0x118] sm:$0xff] %v1237
        %1302 = vst [vmem:[#allocation2 + $0x120] sm:$0xff] %v1238
        %1303 = vst [vmem:[#allocation2 + $0x128] sm:$0xff] %v1239
        %1304 = vst [vmem:[#allocation2 + $0x130] sm:$0xff] %v1240
        %1305 = vst [vmem:[#allocation2 + $0x138] sm:$0xff] %v1241
        %1306 = vst [vmem:[#allocation2 + $0x140] sm:$0xff] %v1242
        %1307 = vst [vmem:[#allocation2 + $0x148] sm:$0xff] %v1243
        %1308 = vst [vmem:[#allocation2 + $0x150] sm:$0xff] %v1244
        %1309 = vst [vmem:[#allocation2 + $0x158] sm:$0xff] %v1245
        %1310 = vst [vmem:[#allocation2 + $0x160] sm:$0xff] %v1246
        %1311 = vst [vmem:[#allocation2 + $0x168] sm:$0xff] %v1247
        %1312 = vst [vmem:[#allocation2 + $0x170] sm:$0xff] %v1248
        %1313 = vst [vmem:[#allocation2 + $0x178] sm:$0xff] %v1249
        %1314 = vst [vmem:[#allocation2 + $0x180] sm:$0xff] %v1250
        %1315 = vst [vmem:[#allocation2 + $0x188] sm:$0xff] %v1251
        %1316 = vst [vmem:[#allocation2 + $0x190] sm:$0xff] %v1252
        %1317 = vst [vmem:[#allocation2 + $0x198] sm:$0xff] %v1253
        %1318 = vst [vmem:[#allocation2 + $0x1a0] sm:$0xff] %v1254
        %1319 = vst [vmem:[#allocation2 + $0x1a8] sm:$0xff] %v1255
        %1320 = vst [vmem:[#allocation2 + $0x1b0] sm:$0xff] %v1256
        %1321 = vst [vmem:[#allocation2 + $0x1b8] sm:$0xff] %v1257
        %1322 = vst [vmem:[#allocation2 + $0x1c0] sm:$0xff] %v1258
        %1323 = vst [vmem:[#allocation2 + $0x1c8] sm:$0xff] %v1259
        %1324 = vst [vmem:[#allocation2 + $0x1d0] sm:$0xff] %v1260
        %1325 = vst [vmem:[#allocation2 + $0x1d8] sm:$0xff] %v1261
        %1326 = vst [vmem:[#allocation2 + $0x1e0] sm:$0xff] %v1262
        %1327 = vst [vmem:[#allocation2 + $0x1e8] sm:$0xff] %v1263
        %1328 = vst [vmem:[#allocation2 + $0x1f0] sm:$0xff] %v1264
        %1329 = vst [vmem:[#allocation2 + $0x1f8] sm:$0xff] %v1265
        %p1330 = scmp.eq.s32.totalorder %s35, 1
        // Predicated region
        $region61: #{tpu_custom_call.1} parent=39 // pred_check
          %p1331 = pneg %p1330
        $region62: #{tpu_custom_call.1} parent=39 // pred_check_branch
          %1333 = sbr.rel (%p1331) target = $region64
        $region63: #{tpu_custom_call.1} parent=39 // pred_region
          %v1334 = vld [vmem:[#allocation2] sm:$0xff]
          %v1335 = vld [vmem:[#allocation2 + $0x8] sm:$0xff]
          %v1336 = vld [vmem:[#allocation2 + $0x10] sm:$0xff]
          %v1337 = vld [vmem:[#allocation2 + $0x18] sm:$0xff]
          %v1338 = vld [vmem:[#allocation2 + $0x20] sm:$0xff]
          %v1339 = vld [vmem:[#allocation2 + $0x28] sm:$0xff]
          %v1340 = vld [vmem:[#allocation2 + $0x30] sm:$0xff]
          %v1341 = vld [vmem:[#allocation2 + $0x38] sm:$0xff]
          %v1342 = vld [vmem:[#allocation2 + $0x40] sm:$0xff]
          %v1343 = vld [vmem:[#allocation2 + $0x48] sm:$0xff]
          %v1344 = vld [vmem:[#allocation2 + $0x50] sm:$0xff]
          %v1345 = vld [vmem:[#allocation2 + $0x58] sm:$0xff]
          %v1346 = vld [vmem:[#allocation2 + $0x60] sm:$0xff]
          %v1347 = vld [vmem:[#allocation2 + $0x68] sm:$0xff]
          %v1348 = vld [vmem:[#allocation2 + $0x70] sm:$0xff]
          %v1349 = vld [vmem:[#allocation2 + $0x78] sm:$0xff]
          %v1350 = vld [vmem:[#allocation2 + $0x80] sm:$0xff]
          %v1351 = vld [vmem:[#allocation2 + $0x88] sm:$0xff]
          %v1352 = vld [vmem:[#allocation2 + $0x90] sm:$0xff]
          %v1353 = vld [vmem:[#allocation2 + $0x98] sm:$0xff]
          %v1354 = vld [vmem:[#allocation2 + $0xa0] sm:$0xff]
          %v1355 = vld [vmem:[#allocation2 + $0xa8] sm:$0xff]
          %v1356 = vld [vmem:[#allocation2 + $0xb0] sm:$0xff]
          %v1357 = vld [vmem:[#allocation2 + $0xb8] sm:$0xff]
          %v1358 = vld [vmem:[#allocation2 + $0xc0] sm:$0xff]
          %v1359 = vld [vmem:[#allocation2 + $0xc8] sm:$0xff]
          %v1360 = vld [vmem:[#allocation2 + $0xd0] sm:$0xff]
          %v1361 = vld [vmem:[#allocation2 + $0xd8] sm:$0xff]
          %v1362 = vld [vmem:[#allocation2 + $0xe0] sm:$0xff]
          %v1363 = vld [vmem:[#allocation2 + $0xe8] sm:$0xff]
          %v1364 = vld [vmem:[#allocation2 + $0xf0] sm:$0xff]
          %v1365 = vld [vmem:[#allocation2 + $0xf8] sm:$0xff]
          %v1366 = vld [vmem:[#allocation2 + $0x100] sm:$0xff]
          %v1367 = vld [vmem:[#allocation2 + $0x108] sm:$0xff]
          %v1368 = vld [vmem:[#allocation2 + $0x110] sm:$0xff]
          %v1369 = vld [vmem:[#allocation2 + $0x118] sm:$0xff]
          %v1370 = vld [vmem:[#allocation2 + $0x120] sm:$0xff]
          %v1371 = vld [vmem:[#allocation2 + $0x128] sm:$0xff]
          %v1372 = vld [vmem:[#allocation2 + $0x130] sm:$0xff]
          %v1373 = vld [vmem:[#allocation2 + $0x138] sm:$0xff]
          %v1374 = vld [vmem:[#allocation2 + $0x140] sm:$0xff]
          %v1375 = vld [vmem:[#allocation2 + $0x148] sm:$0xff]
          %v1376 = vld [vmem:[#allocation2 + $0x150] sm:$0xff]
          %v1377 = vld [vmem:[#allocation2 + $0x158] sm:$0xff]
          %v1378 = vld [vmem:[#allocation2 + $0x160] sm:$0xff]
          %v1379 = vld [vmem:[#allocation2 + $0x168] sm:$0xff]
          %v1380 = vld [vmem:[#allocation2 + $0x170] sm:$0xff]
          %v1381 = vld [vmem:[#allocation2 + $0x178] sm:$0xff]
          %v1382 = vld [vmem:[#allocation2 + $0x180] sm:$0xff]
          %v1383 = vld [vmem:[#allocation2 + $0x188] sm:$0xff]
          %v1384 = vld [vmem:[#allocation2 + $0x190] sm:$0xff]
          %v1385 = vld [vmem:[#allocation2 + $0x198] sm:$0xff]
          %v1386 = vld [vmem:[#allocation2 + $0x1a0] sm:$0xff]
          %v1387 = vld [vmem:[#allocation2 + $0x1a8] sm:$0xff]
          %v1388 = vld [vmem:[#allocation2 + $0x1b0] sm:$0xff]
          %v1389 = vld [vmem:[#allocation2 + $0x1b8] sm:$0xff]
          %v1390 = vld [vmem:[#allocation2 + $0x1c0] sm:$0xff]
          %v1391 = vld [vmem:[#allocation2 + $0x1c8] sm:$0xff]
          %v1392 = vld [vmem:[#allocation2 + $0x1d0] sm:$0xff]
          %v1393 = vld [vmem:[#allocation2 + $0x1d8] sm:$0xff]
          %v1394 = vld [vmem:[#allocation2 + $0x1e0] sm:$0xff]
          %v1395 = vld [vmem:[#allocation2 + $0x1e8] sm:$0xff]
          %v1396 = vld [vmem:[#allocation2 + $0x1f0] sm:$0xff]
          %v1397 = vld [vmem:[#allocation2 + $0x1f8] sm:$0xff]
          %1398 = vst [vmem:[%s403] sm:$0xff] %v1334
          %1399 = vst [vmem:[%s403 + $0x8] sm:$0xff] %v1335
          %1400 = vst [vmem:[%s403 + $0x10] sm:$0xff] %v1336
          %1401 = vst [vmem:[%s403 + $0x18] sm:$0xff] %v1337
          %1402 = vst [vmem:[%s403 + $0x20] sm:$0xff] %v1338
          %1403 = vst [vmem:[%s403 + $0x28] sm:$0xff] %v1339
          %1404 = vst [vmem:[%s403 + $0x30] sm:$0xff] %v1340
          %1405 = vst [vmem:[%s403 + $0x38] sm:$0xff] %v1341
          %1406 = vst [vmem:[%s403 + $0x40] sm:$0xff] %v1342
          %1407 = vst [vmem:[%s403 + $0x48] sm:$0xff] %v1343
          %1408 = vst [vmem:[%s403 + $0x50] sm:$0xff] %v1344
          %1409 = vst [vmem:[%s403 + $0x58] sm:$0xff] %v1345
          %1410 = vst [vmem:[%s403 + $0x60] sm:$0xff] %v1346
          %1411 = vst [vmem:[%s403 + $0x68] sm:$0xff] %v1347
          %1412 = vst [vmem:[%s403 + $0x70] sm:$0xff] %v1348
          %1413 = vst [vmem:[%s403 + $0x78] sm:$0xff] %v1349
          %1414 = vst [vmem:[%s403 + $0x80] sm:$0xff] %v1350
          %1415 = vst [vmem:[%s403 + $0x88] sm:$0xff] %v1351
          %1416 = vst [vmem:[%s403 + $0x90] sm:$0xff] %v1352
          %1417 = vst [vmem:[%s403 + $0x98] sm:$0xff] %v1353
          %1418 = vst [vmem:[%s403 + $0xa0] sm:$0xff] %v1354
          %1419 = vst [vmem:[%s403 + $0xa8] sm:$0xff] %v1355
          %1420 = vst [vmem:[%s403 + $0xb0] sm:$0xff] %v1356
          %1421 = vst [vmem:[%s403 + $0xb8] sm:$0xff] %v1357
          %1422 = vst [vmem:[%s403 + $0xc0] sm:$0xff] %v1358
          %1423 = vst [vmem:[%s403 + $0xc8] sm:$0xff] %v1359
          %1424 = vst [vmem:[%s403 + $0xd0] sm:$0xff] %v1360
          %1425 = vst [vmem:[%s403 + $0xd8] sm:$0xff] %v1361
          %1426 = vst [vmem:[%s403 + $0xe0] sm:$0xff] %v1362
          %1427 = vst [vmem:[%s403 + $0xe8] sm:$0xff] %v1363
          %1428 = vst [vmem:[%s403 + $0xf0] sm:$0xff] %v1364
          %1429 = vst [vmem:[%s403 + $0xf8] sm:$0xff] %v1365
          %1430 = vst [vmem:[%s403 + $0x100] sm:$0xff] %v1366
          %1431 = vst [vmem:[%s403 + $0x108] sm:$0xff] %v1367
          %1432 = vst [vmem:[%s403 + $0x110] sm:$0xff] %v1368
          %1433 = vst [vmem:[%s403 + $0x118] sm:$0xff] %v1369
          %1434 = vst [vmem:[%s403 + $0x120] sm:$0xff] %v1370
          %1435 = vst [vmem:[%s403 + $0x128] sm:$0xff] %v1371
          %1436 = vst [vmem:[%s403 + $0x130] sm:$0xff] %v1372
          %1437 = vst [vmem:[%s403 + $0x138] sm:$0xff] %v1373
          %1438 = vst [vmem:[%s403 + $0x140] sm:$0xff] %v1374
          %1439 = vst [vmem:[%s403 + $0x148] sm:$0xff] %v1375
          %1440 = vst [vmem:[%s403 + $0x150] sm:$0xff] %v1376
          %1441 = vst [vmem:[%s403 + $0x158] sm:$0xff] %v1377
          %1442 = vst [vmem:[%s403 + $0x160] sm:$0xff] %v1378
          %1443 = vst [vmem:[%s403 + $0x168] sm:$0xff] %v1379
          %1444 = vst [vmem:[%s403 + $0x170] sm:$0xff] %v1380
          %1445 = vst [vmem:[%s403 + $0x178] sm:$0xff] %v1381
          %1446 = vst [vmem:[%s403 + $0x180] sm:$0xff] %v1382
          %1447 = vst [vmem:[%s403 + $0x188] sm:$0xff] %v1383
          %1448 = vst [vmem:[%s403 + $0x190] sm:$0xff] %v1384
          %1449 = vst [vmem:[%s403 + $0x198] sm:$0xff] %v1385
          %1450 = vst [vmem:[%s403 + $0x1a0] sm:$0xff] %v1386
          %1451 = vst [vmem:[%s403 + $0x1a8] sm:$0xff] %v1387
          %1452 = vst [vmem:[%s403 + $0x1b0] sm:$0xff] %v1388
          %1453 = vst [vmem:[%s403 + $0x1b8] sm:$0xff] %v1389
          %1454 = vst [vmem:[%s403 + $0x1c0] sm:$0xff] %v1390
          %1455 = vst [vmem:[%s403 + $0x1c8] sm:$0xff] %v1391
          %1456 = vst [vmem:[%s403 + $0x1d0] sm:$0xff] %v1392
          %1457 = vst [vmem:[%s403 + $0x1d8] sm:$0xff] %v1393
          %1458 = vst [vmem:[%s403 + $0x1e0] sm:$0xff] %v1394
          %1459 = vst [vmem:[%s403 + $0x1e8] sm:$0xff] %v1395
          %1460 = vst [vmem:[%s403 + $0x1f0] sm:$0xff] %v1396
          %1461 = vst [vmem:[%s403 + $0x1f8] sm:$0xff] %v1397
        $region64: #{tpu_custom_call.1} parent=39 // pred_fallthru
          _
        %s1462 = sand.u32 %s191, 1
        %s1463 = scalar_lea.sflag [#allocation5], %s1462
        %s1464 = sand.u32 %s191, 1
        %s1465 = smul.addr %s1464, 512
        %s1466 = scalar_lea.vmem [#allocation11], %s1465
        // Predicated region
        $region65: #{tpu_custom_call.1} parent=39 // pred_check
          %p1467 = pneg %p201
        $region66: #{tpu_custom_call.1} parent=39 // pred_check_branch
          %1469 = sbr.rel (%p1467) target = $region68
        $region67: #{tpu_custom_call.1} parent=39 // pred_region
          %s1470 = smul.u32 32, %s33
          %s1471 = smul.u32 2, %s34
          %s1473 = ssub.s32 8192, 8192
          %1474 = vsyncadd %s1463, %s1473
          %s1475 = smul.addr %s1470, 4
          %s1476 = sadd.s32 %s1471, %s1475
          %s1477 = smul.addr %s1476, 128
          %s1478 = scalar_lea.hbm %s5, %s1477
          %s1479 = sshll.u32 %s1466, 4
          %s1480 = int_to_ptr.vmem [resolvable:$true] %s1479
          %1485 = dma.vmem_to_hbm [thread:$0]  %s1480, 8192, %s1478, %s1463, 256, 512, 16
        $region68: #{tpu_custom_call.1} parent=39 // pred_fallthru
          _
      $region40: #{tpu_custom_call.1} parent=5 // pred_fallthru
        _
      %p1486 = scmp.le.s32.totalorder 2, %s23
      // Predicated region
      $region69: #{tpu_custom_call.1} parent=5 // pred_check
        %p1487 = pneg %p1486
      $region70: #{tpu_custom_call.1} parent=5 // pred_check_branch
        %1489 = sbr.rel (%p1487) target = $region72
      $region71: #{tpu_custom_call.1} parent=5 // pred_region
        %s1490 = ssub.s32 %s23, 2
        // Predicated region
        $region73: #{tpu_custom_call.1} parent=71 // pred_check
          %p1491 = pneg %p207
        $region74: #{tpu_custom_call.1} parent=71 // pred_check_branch
          %1493 = sbr.rel (%p1491) target = $region76
        $region75: #{tpu_custom_call.1} parent=71 // pred_region
          %s1494 = sand.u32 %s192, 1
          %s1495 = scalar_lea.sflag [#allocation5], %s1494
          %s1496 = sand.u32 %s192, 1
          %s1497 = smul.addr %s1496, 512
          %s1498 = scalar_lea.vmem [#allocation11], %s1497
          %1499 = dma.done %s1495, 8192
        $region76: #{tpu_custom_call.1} parent=71 // pred_fallthru
          _
      $region72: #{tpu_custom_call.1} parent=5 // pred_fallthru
        _
    $region6: #{tpu_custom_call.1} parent=1 // loop_footer
      %s27 = sadd.s32 1, %s23
    $region7: #{tpu_custom_call.1} parent=1 // loop_footer_branch
      %22 = sbr.rel target = $region3
    $region8: #{tpu_custom_call.1} parent=1 // loop_exit
      _
    %1500 = vsyncpa [#allocation4], 1
    %s1501 = scalar_lea.sflag [#allocation4], 1
    %1502 = vsyncpa %s1501, 1
    %1503 = vsyncpa [#allocation7], 1
    %s1504 = scalar_lea.sflag [#allocation7], 1
    %1505 = vsyncpa %s1504, 1
    %1506 = vsyncpa [#allocation10], 1
    %s1507 = scalar_lea.sflag [#allocation10], 1
    %1508 = vsyncpa %s1507, 1
    %1509 = vsyncpa [#allocation5], 1
    %s1510 = scalar_lea.sflag [#allocation5], 1
    %1511 = vsyncpa %s1510, 1

</llo_original>
